<compile_context>
chip_gen: v6e
topology: v6e:2x2x1
jax: 0.10.0
libtpu: 0.0.40
codegen_flags: <defaults>
</compile_context>

<pallas_src>
import functools

import jax
import jax.numpy as jnp
from jax import lax
from jax.experimental import pallas as pl
from jax.experimental.pallas import tpu as pltpu


def _light_att_kernel(q_ref, k_ref, v_ref, bias_ref,
                      wq_ref, wk_ref, wv_ref, wp_ref, bp_ref,
                      out_ref,
                      o_acc, k_cache, v_cache,
                      *, num_heads, head_dim, scale, nk_chunk):
    f32 = jnp.float32
    bf16 = jnp.bfloat16
    nk_total = k_cache.shape[0]
    num_kc = nk_total // nk_chunk

    # K/V projections: once per batch element (first Nq tile only), cached in
    # VMEM scratch and reused by every subsequent Nq tile of this batch.
    @pl.when(pl.program_id(1) == 0)
    def _():
        k_cache[...] = jnp.dot(k_ref[...], wk_ref[...],
                               preferred_element_type=f32).astype(bf16)
        v_cache[...] = jnp.dot(v_ref[...], wv_ref[...],
                               preferred_element_type=f32).astype(bf16)

    # Q projection for this Nq tile; scale folded into q once, in f32, before
    # the bf16 cast (TQ*C multiplies instead of heads*TQ*Nk).
    q = jnp.dot(q_ref[...], wq_ref[...], preferred_element_type=f32) * scale
    q_b = q.astype(bf16)

    if num_kc == 1:
        att_bias = bias_ref[...].astype(f32)     # (TQ, Nk) shared by all heads

    # TODO(synk): when head_dim < 128, audit the Mosaic dump for lane-slice
    # relayouts / vst.msk from these per-head slices; a head-major batched
    # lax.dot_general layout may be faster if they show up.
    for h in range(num_heads):
        hsl = slice(h * head_dim, (h + 1) * head_dim)
        q_h = q_b[:, hsl]

        if num_kc == 1:
            # Direct path: full (TQ, Nk) scores are small enough to stay live.
            s = lax.dot_general(q_h, k_cache[:, hsl],
                                dimension_numbers=(((1,), (1,)), ((), ())),
                                preferred_element_type=f32)
            s = s + att_bias
            s = s - jnp.max(s, axis=-1, keepdims=True)
            p = jnp.exp(s)
            inv = pl.reciprocal(jnp.sum(p, axis=-1, keepdims=True), approx=True)
            o_h = jnp.dot(p.astype(bf16), v_cache[:, hsl],
                          preferred_element_type=f32)
            o_acc[:, hsl] = o_h * inv            # normalize after the PV matmul
        else:
            # Online-softmax path: bound live f32 scores to (TQ, nk_chunk).
            tq = q_h.shape[0]
            m_i = jnp.full((tq, 1), -jnp.inf, dtype=f32)
            l_i = jnp.zeros((tq, 1), dtype=f32)
            acc = jnp.zeros((tq, head_dim), dtype=f32)
            for c in range(num_kc):
                ksl = slice(c * nk_chunk, (c + 1) * nk_chunk)
                s = lax.dot_general(q_h, k_cache[ksl, hsl],
                                    dimension_numbers=(((1,), (1,)), ((), ())),
                                    preferred_element_type=f32)
                s = s + bias_ref[:, ksl].astype(f32)
                m_new = jnp.maximum(m_i, jnp.max(s, axis=-1, keepdims=True))
                alpha = jnp.exp(m_i - m_new)
                p = jnp.exp(s - m_new)
                l_i = alpha * l_i + jnp.sum(p, axis=-1, keepdims=True)
                acc = alpha * acc + jnp.dot(p.astype(bf16), v_cache[ksl, hsl],
                                            preferred_element_type=f32)
                m_i = m_new
            inv = pl.reciprocal(l_i, approx=True)
            o_acc[:, hsl] = acc * inv

    # Output projection from the slab: Linear(dim, out_dim) with bias.
    out = jnp.dot(o_acc[...].astype(bf16), wp_ref[...],
                  preferred_element_type=f32) + bp_ref[...]
    out_ref[...] = out.astype(out_ref.dtype)


def light_att_module(query, key, value, att_bias, params, *, num_heads,
                     tq=None, nk_chunk=None):
    """query: (B, Nq, C); key/value: (B, Nk, C); att_bias: (B, Nq, Nk).

    Returns (B, Nq, out_dim) in query.dtype.
    """
    B, Nq, C = query.shape
    _, Nk, _ = key.shape
    _, Nv, _ = value.shape
    assert C % num_heads == 0, "dim must be divisible by num_heads"
    assert Nk == Nv, "key/value token counts must match"
    head_dim = C // num_heads
    scale = head_dim ** (-0.5)
    out_dim = params["wp"].shape[1]
    out_dtype = query.dtype
    out_isize = jnp.dtype(out_dtype).itemsize

    bf16, f32 = jnp.bfloat16, jnp.float32

    # Nk chunk for online softmax (bounds live f32 score residency per head).
    if nk_chunk is None:
        nk_chunk = Nk
        if Nk > 512:
            for t in (512, 256, 128, 64):
                if Nk % t == 0:
                    nk_chunk = t
                    break
    assert Nk % nk_chunk == 0, "nk_chunk must divide Nk"

    # VMEM capacity per core (v5e/v6e 128 MiB, v7x 64 MiB); conservative
    # fallback if the query is unavailable.
    try:
        vmem_cap = int(pltpu.get_tpu_info().vmem_capacity_bytes)
    except Exception:  # pragma: no cover
        vmem_cap = 64 << 20

    def est_vmem(tq_):
        est = tq_ * C * 2 * 2                                 # query tile (x2 bufs)
        est += 2 * Nk * C * 2                                 # key+value (single buf)
        est += tq_ * Nk * 2 * 2                               # bias tile (x2 bufs)
        est += (3 * C * C + C * out_dim) * 2 + out_dim * 4    # weights/bias (single)
        est += tq_ * out_dim * out_isize * 2                  # output tile (x2 bufs)
        est += tq_ * C * 4 + 2 * Nk * C * 2                   # o_acc slab + K/V caches
        est += Nk * C * 4                                     # transient f32 K/V proj
        est += 2 * tq_ * min(nk_chunk, Nk) * 4                # transient s / p scores
        return est

    # Pick an Nq tile: biggest divisor (up to 512) that fits the VMEM budget.
    if tq is None:
        budget = int(0.75 * vmem_cap)
        tq = Nq
        for t in (512, 256, 128, 64, 32, 16, 8):
            if Nq % t == 0 and est_vmem(t) <= budget:
                tq = t
                break
    assert Nq % tq == 0 and (tq % 8 == 0 or tq == Nq), "bad Nq tile"

    # Cast MXU operands (and the large att_bias tensor) to bf16 once, outside
    # the kernel: halves DMA bytes and VMEM residency.
    q_in = query.astype(bf16)
    k_in = key.astype(bf16)
    v_in = value.astype(bf16)
    bias = att_bias.astype(bf16)
    wq = params["wq"].astype(bf16)
    wk = params["wk"].astype(bf16)
    wv = params["wv"].astype(bf16)
    wp = params["wp"].astype(bf16)
    bp = params["bp"].astype(f32).reshape(1, out_dim)

    kernel = functools.partial(
        _light_att_kernel, num_heads=num_heads, head_dim=head_dim,
        scale=scale, nk_chunk=nk_chunk)

    def const_spec(shape):
        # Weights/bias never change across the grid: single-buffer them.
        return pl.BlockSpec(shape, lambda b, qi: (0,) * len(shape),
                            pipeline_mode=pl.Buffered(1))

    sq = pl.Squeezed()
    grid = (B, Nq // tq)
    grid_spec = pltpu.PrefetchScalarGridSpec(
        num_scalar_prefetch=0,
        grid=grid,
        in_specs=[
            pl.BlockSpec((sq, tq, C), lambda b, qi: (b, qi, 0)),    # query tile
            # key/value block index only changes at the B boundary: single
            # buffer to save Nk*C*2 bytes each (review: v7x VMEM pressure).
            pl.BlockSpec((sq, Nk, C), lambda b, qi: (b, 0, 0),
                         pipeline_mode=pl.Buffered(1)),             # key (full)
            pl.BlockSpec((sq, Nk, C), lambda b, qi: (b, 0, 0),
                         pipeline_mode=pl.Buffered(1)),             # value (full)
            pl.BlockSpec((sq, tq, Nk), lambda b, qi: (b, qi, 0)),   # att_bias tile
            const_spec((C, C)),                                     # Wq
            const_spec((C, C)),                                     # Wk
            const_spec((C, C)),                                     # Wv
            const_spec((C, out_dim)),                               # Wp
            const_spec((1, out_dim)),                               # bp
        ],
        out_specs=pl.BlockSpec((sq, tq, out_dim), lambda b, qi: (b, qi, 0)),
        scratch_shapes=[
            pltpu.VMEM((tq, C), f32),      # per-head output slab
            pltpu.VMEM((Nk, C), bf16),     # projected K cache (per batch elem)
            pltpu.VMEM((Nk, C), bf16),     # projected V cache (per batch elem)
        ],
    )

    # Advisory cost for XLA scheduling around the custom call. K/V projection
    # is counted once per batch element, matching the cached execution.
    flops = B * (2 * Nq * C * C + 4 * Nk * C * C + 4 * Nq * Nk * C
                 + 2 * Nq * C * out_dim)
    transcendentals = B * num_heads * Nq * Nk
    bytes_accessed = (2 * (q_in.size + k_in.size + v_in.size + bias.size)
                      + 2 * (wq.size + wk.size + wv.size + wp.size)
                      + 4 * bp.size
                      + B * Nq * out_dim * out_isize)

    vmem_limit = int(min(vmem_cap, max(32 << 20, int(est_vmem(tq) * 1.25))))

    return pl.pallas_call(
        kernel,
        out_shape=jax.ShapeDtypeStruct((B, Nq, out_dim), out_dtype),
        grid_spec=grid_spec,
        compiler_params=pltpu.CompilerParams(
            # B parallel (megacore sharding keeps a per-core K/V cache); qi
            # arbitrary so the cache computed at qi == 0 is reused in order.
            dimension_semantics=("parallel", "arbitrary"),
            vmem_limit_bytes=vmem_limit),
        cost_estimate=pl.CostEstimate(flops=flops,
                                      transcendentals=transcendentals,
                                      bytes_accessed=bytes_accessed),
    )(q_in, k_in, v_in, bias, wq, wk, wv, wp, bp)


def _reference(query, key, value, att_bias, params, *, num_heads):
    """Pure-JAX reference mirroring the kernel's bf16-operand / f32-accum policy."""
    B, Nq, C = query.shape
    hd = C // num_heads
    scale = hd ** (-0.5)
    out_dim = params["wp"].shape[1]
    bf16, f32 = jnp.bfloat16, jnp.float32

    def proj(x, w):
        return jnp.dot(x.astype(bf16), w.astype(bf16), preferred_element_type=f32)

    def split(x):
        b, n, c = x.shape
        return x.reshape(b, n, num_heads, hd).transpose(0, 2, 1, 3)

    q = split(proj(query, params["wq"]) * scale).astype(bf16)
    k = split(proj(key, params["wk"])).astype(bf16)
    v = split(proj(value, params["wv"])).astype(bf16)

    s = jnp.einsum("bhnc,bhmc->bhnm", q, k, preferred_element_type=f32)
    s = s + att_bias[:, None, :, :]
    p = jax.nn.softmax(s, axis=-1)
    o = jnp.einsum("bhnm,bhmc->bhnc", p.astype(bf16), v,
                   preferred_element_type=f32)
    o = o.transpose(0, 2, 1, 3).reshape(B, Nq, C)
    out = jnp.dot(o.astype(bf16), params["wp"].astype(bf16),
                  preferred_element_type=f32) + params["bp"].reshape(1, out_dim)
    return out


if __name__ == "__main__":
    f32 = jnp.float32
    root = jax.random.PRNGKey(0)
    case_keys = jax.random.split(root, 2)

    def run_case(case_key, B, Nq, Nk, dim, num_heads, out_dim, **kw):
        ks = jax.random.split(case_key, 9)
        query = jax.random.normal(ks[0], (B, Nq, dim), dtype=f32)
        key_t = jax.random.normal(ks[1], (B, Nk, dim), dtype=f32)
        value = jax.random.normal(ks[2], (B, Nk, dim), dtype=f32)
        att_bias = 0.1 * jax.random.normal(ks[3], (B, Nq, Nk), dtype=f32)
        params = {
            # Linear weights stored as (in, out) so the kernel computes x @ W.
            "wq": 0.1 * jax.random.normal(ks[4], (dim, dim), dtype=f32),
            "wk": 0.1 * jax.random.normal(ks[5], (dim, dim), dtype=f32),
            "wv": 0.1 * jax.random.normal(ks[6], (dim, dim), dtype=f32),
            "wp": 0.1 * jax.random.normal(ks[7], (dim, out_dim), dtype=f32),
            "bp": 0.1 * jax.random.normal(ks[8], (1, out_dim), dtype=f32),
        }
        out = light_att_module(query, key_t, value, att_bias, params,
                               num_heads=num_heads, **kw)
        out = jax.block_until_ready(out)
        ref = _reference(query, key_t, value, att_bias, params,
                         num_heads=num_heads)
        assert out.shape == (B, Nq, out_dim)
        max_err = float(jnp.max(jnp.abs(out - ref)))
        # bf16 MXU operands, bf16 bias, approx reciprocal vs exact softmax div.
        assert jnp.allclose(out, ref, atol=2e-2, rtol=2e-2), (
            f"mismatch vs reference (max abs err {max_err:.2e})")

    # Case 1: two Nq tiles per batch -> exercises K/V-cache reuse across tiles.
    run_case(case_keys[0], B=2, Nq=128, Nk=64, dim=128, num_heads=4,
             out_dim=128, tq=64)
    # Case 2: Nk split into chunks -> exercises the online-softmax path.
    run_case(case_keys[1], B=2, Nq=64, Nk=256, dim=128, num_heads=4,
             out_dim=128, nk_chunk=128)

    print("KERNEL_OK")
</pallas_src>

<mosaic_0001>
module attributes {stable_mosaic.version = 11 : i64} {
  func.func @_light_att_kernel(%arg0: i32, %arg1: i32, %arg2: memref<1x64x128xbf16, #tpu.memory_space<vmem>>, %arg3: memref<1x64x128xbf16, #tpu.memory_space<vmem>>, %arg4: memref<1x64x128xbf16, #tpu.memory_space<vmem>>, %arg5: memref<1x64x64xbf16, #tpu.memory_space<vmem>>, %arg6: memref<128x128xbf16, #tpu.memory_space<vmem>>, %arg7: memref<128x128xbf16, #tpu.memory_space<vmem>>, %arg8: memref<128x128xbf16, #tpu.memory_space<vmem>>, %arg9: memref<128x128xbf16, #tpu.memory_space<vmem>>, %arg10: memref<1x128xf32, #tpu.memory_space<vmem>>, %arg11: memref<1x64x128xf32, #tpu.memory_space<vmem>>, %arg12: memref<64x128xf32, #tpu.memory_space<vmem>>, %arg13: memref<64x128xbf16, #tpu.memory_space<vmem>>, %arg14: memref<64x128xbf16, #tpu.memory_space<vmem>>) attributes {dimension_semantics = [#tpu.dimension_semantics<parallel>, #tpu.dimension_semantics<arbitrary>], iteration_bounds = array<i64: 2, 2>, scalar_prefetch = 0 : i64, scratch_operands = 3 : i64, tpu.core_type = #tpu.core_type<tc>, window_params = [{transform_indices = @transform_0, window_bounds = array<i64: 1, 64, 128>}, {pipeline_mode = #tpu.pipeline_mode<synchronous>, transform_indices = @transform_1, window_bounds = array<i64: 1, 64, 128>}, {pipeline_mode = #tpu.pipeline_mode<synchronous>, transform_indices = @transform_2, window_bounds = array<i64: 1, 64, 128>}, {transform_indices = @transform_3, window_bounds = array<i64: 1, 64, 64>}, {pipeline_mode = #tpu.pipeline_mode<synchronous>, transform_indices = @transform_4, window_bounds = array<i64: 128, 128>}, {pipeline_mode = #tpu.pipeline_mode<synchronous>, transform_indices = @transform_5, window_bounds = array<i64: 128, 128>}, {pipeline_mode = #tpu.pipeline_mode<synchronous>, transform_indices = @transform_6, window_bounds = array<i64: 128, 128>}, {pipeline_mode = #tpu.pipeline_mode<synchronous>, transform_indices = @transform_7, window_bounds = array<i64: 128, 128>}, {pipeline_mode = #tpu.pipeline_mode<synchronous>, transform_indices = @transform_8, window_bounds = array<i64: 1, 128>}, {transform_indices = @transform_9, window_bounds = array<i64: 1, 64, 128>}]} {
    %c0_i32 = arith.constant 0 : i32
    %0 = arith.cmpi eq, %arg1, %c0_i32 : i32
    %1 = arith.extui %0 : i1 to i32
    %c0_i32_0 = arith.constant 0 : i32
    %2 = arith.cmpi ne, %1, %c0_i32_0 : i32
    scf.if %2 {
      %c0_56 = arith.constant 0 : index
      %c0_57 = arith.constant 0 : index
      %c0_58 = arith.constant 0 : index
      %95 = vector.load %arg3[%c0_56, %c0_57, %c0_58] : memref<1x64x128xbf16, #tpu.memory_space<vmem>>, vector<1x64x128xbf16>
      %96 = vector.shape_cast %95 : vector<1x64x128xbf16> to vector<64x128xbf16>
      %c0_59 = arith.constant 0 : index
      %c0_60 = arith.constant 0 : index
      %97 = vector.load %arg7[%c0_59, %c0_60] : memref<128x128xbf16, #tpu.memory_space<vmem>>, vector<128x128xbf16>
      %cst_61 = arith.constant dense<0.000000e+00> : vector<64x128xf32>
      %98 = tpu.matmul %96, %97, %cst_61 {dimension_numbers = #tpu.dot_dimension_numbers<[1], [0], [0], [1], [0, 0, 1, 1], [], []>} : vector<64x128xbf16>, vector<128x128xbf16>, vector<64x128xf32> -> vector<64x128xf32>
      %99 = arith.truncf %98 : vector<64x128xf32> to vector<64x128xbf16>
      %c0_62 = arith.constant 0 : index
      %c0_63 = arith.constant 0 : index
      %100 = vector.load %arg13[%c0_62, %c0_63] : memref<64x128xbf16, #tpu.memory_space<vmem>>, vector<64x128xbf16>
      tpu.vector_store %arg13[%c0_62, %c0_63], %99 {strides = array<i32>} : memref<64x128xbf16, #tpu.memory_space<vmem>>, vector<64x128xbf16>,
      %c0_64 = arith.constant 0 : index
      %c0_65 = arith.constant 0 : index
      %c0_66 = arith.constant 0 : index
      %101 = vector.load %arg4[%c0_64, %c0_65, %c0_66] : memref<1x64x128xbf16, #tpu.memory_space<vmem>>, vector<1x64x128xbf16>
      %102 = vector.shape_cast %101 : vector<1x64x128xbf16> to vector<64x128xbf16>
      %c0_67 = arith.constant 0 : index
      %c0_68 = arith.constant 0 : index
      %103 = vector.load %arg8[%c0_67, %c0_68] : memref<128x128xbf16, #tpu.memory_space<vmem>>, vector<128x128xbf16>
      %cst_69 = arith.constant dense<0.000000e+00> : vector<64x128xf32>
      %104 = tpu.matmul %102, %103, %cst_69 {dimension_numbers = #tpu.dot_dimension_numbers<[1], [0], [0], [1], [0, 0, 1, 1], [], []>} : vector<64x128xbf16>, vector<128x128xbf16>, vector<64x128xf32> -> vector<64x128xf32>
      %105 = arith.truncf %104 : vector<64x128xf32> to vector<64x128xbf16>
      %c0_70 = arith.constant 0 : index
      %c0_71 = arith.constant 0 : index
      %106 = vector.load %arg14[%c0_70, %c0_71] : memref<64x128xbf16, #tpu.memory_space<vmem>>, vector<64x128xbf16>
      tpu.vector_store %arg14[%c0_70, %c0_71], %105 {strides = array<i32>} : memref<64x128xbf16, #tpu.memory_space<vmem>>, vector<64x128xbf16>,
    } else {
    }
    %c0 = arith.constant 0 : index
    %c0_1 = arith.constant 0 : index
    %c0_2 = arith.constant 0 : index
    %3 = vector.load %arg2[%c0, %c0_1, %c0_2] : memref<1x64x128xbf16, #tpu.memory_space<vmem>>, vector<1x64x128xbf16>
    %4 = vector.shape_cast %3 : vector<1x64x128xbf16> to vector<64x128xbf16>
    %c0_3 = arith.constant 0 : index
    %c0_4 = arith.constant 0 : index
    %5 = vector.load %arg6[%c0_3, %c0_4] : memref<128x128xbf16, #tpu.memory_space<vmem>>, vector<128x128xbf16>
    %cst = arith.constant dense<0.000000e+00> : vector<64x128xf32>
    %6 = tpu.matmul %4, %5, %cst {dimension_numbers = #tpu.dot_dimension_numbers<[1], [0], [0], [1], [0, 0, 1, 1], [], []>} : vector<64x128xbf16>, vector<128x128xbf16>, vector<64x128xf32> -> vector<64x128xf32>
    %cst_5 = arith.constant 0.176776692 : f32
    %7 = vector.broadcast %cst_5 : f32 to vector<64x128xf32>
    %8 = arith.mulf %6, %7 : vector<64x128xf32>
    %9 = arith.truncf %8 : vector<64x128xf32> to vector<64x128xbf16>
    %c0_6 = arith.constant 0 : index
    %c0_7 = arith.constant 0 : index
    %c0_8 = arith.constant 0 : index
    %10 = vector.load %arg5[%c0_6, %c0_7, %c0_8] : memref<1x64x64xbf16, #tpu.memory_space<vmem>>, vector<1x64x64xbf16>
    %11 = vector.shape_cast %10 : vector<1x64x64xbf16> to vector<64x64xbf16>
    %12 = arith.extf %11 : vector<64x64xbf16> to vector<64x64xf32>
    %13 = vector.extract_strided_slice %9 {offsets = [0, 0], sizes = [64, 32], strides = [1, 1]} : vector<64x128xbf16> to vector<64x32xbf16>
    %c0_9 = arith.constant 0 : index
    %c0_10 = arith.constant 0 : index
    %14 = vector.load %arg13[%c0_9, %c0_10] : memref<64x128xbf16, #tpu.memory_space<vmem>>, vector<64x32xbf16>
    %cst_11 = arith.constant dense<0.000000e+00> : vector<64x64xf32>
    %15 = tpu.matmul %13, %14, %cst_11 {dimension_numbers = #tpu.dot_dimension_numbers<[1], [1], [0], [0], [0, 0, 1, 0], [], []>} : vector<64x32xbf16>, vector<64x32xbf16>, vector<64x64xf32> -> vector<64x64xf32>
    %16 = arith.addf %15, %12 : vector<64x64xf32>
    %cst_12 = arith.constant dense<0xFF800000> : vector<64xf32>
    %17 = vector.multi_reduction <maximumf>, %16, %cst_12 [1] : vector<64x64xf32> to vector<64xf32>
    %18 = vector.shape_cast %17 : vector<64xf32> to vector<64x1xf32>
    %19 = vector.broadcast %18 : vector<64x1xf32> to vector<64x64xf32>
    %20 = arith.subf %16, %19 : vector<64x64xf32>
    %21 = math.exp %20 : vector<64x64xf32>
    %cst_13 = arith.constant dense<0.000000e+00> : vector<64xf32>
    %22 = vector.multi_reduction <add>, %21, %cst_13 [1] : vector<64x64xf32> to vector<64xf32>
    %23 = vector.shape_cast %22 : vector<64xf32> to vector<64x1xf32>
    %24 = tpu.reciprocal %23 {approx = true} : vector<64x1xf32> -> vector<64x1xf32>
    %25 = arith.truncf %21 : vector<64x64xf32> to vector<64x64xbf16>
    %c0_14 = arith.constant 0 : index
    %c0_15 = arith.constant 0 : index
    %26 = vector.load %arg14[%c0_14, %c0_15] : memref<64x128xbf16, #tpu.memory_space<vmem>>, vector<64x32xbf16>
    %cst_16 = arith.constant dense<0.000000e+00> : vector<64x32xf32>
    %27 = tpu.matmul %25, %26, %cst_16 {dimension_numbers = #tpu.dot_dimension_numbers<[1], [0], [0], [1], [0, 0, 1, 1], [], []>} : vector<64x64xbf16>, vector<64x32xbf16>, vector<64x32xf32> -> vector<64x32xf32>
    %28 = vector.broadcast %24 : vector<64x1xf32> to vector<64x32xf32>
    %29 = arith.mulf %27, %28 : vector<64x32xf32>
    %c0_17 = arith.constant 0 : index
    %c0_18 = arith.constant 0 : index
    %30 = vector.load %arg12[%c0_17, %c0_18] : memref<64x128xf32, #tpu.memory_space<vmem>>, vector<64x32xf32>
    tpu.vector_store %arg12[%c0_17, %c0_18], %29 {strides = array<i32>} : memref<64x128xf32, #tpu.memory_space<vmem>>, vector<64x32xf32>,
    %31 = vector.extract_strided_slice %9 {offsets = [0, 32], sizes = [64, 32], strides = [1, 1]} : vector<64x128xbf16> to vector<64x32xbf16>
    %c0_19 = arith.constant 0 : index
    %c32 = arith.constant 32 : index
    %32 = vector.load %arg13[%c0_19, %c32] : memref<64x128xbf16, #tpu.memory_space<vmem>>, vector<64x32xbf16>
    %cst_20 = arith.constant dense<0.000000e+00> : vector<64x64xf32>
    %33 = tpu.matmul %31, %32, %cst_20 {dimension_numbers = #tpu.dot_dimension_numbers<[1], [1], [0], [0], [0, 0, 1, 0], [], []>} : vector<64x32xbf16>, vector<64x32xbf16>, vector<64x64xf32> -> vector<64x64xf32>
    %34 = arith.addf %33, %12 : vector<64x64xf32>
    %cst_21 = arith.constant dense<0xFF800000> : vector<64xf32>
    %35 = vector.multi_reduction <maximumf>, %34, %cst_21 [1] : vector<64x64xf32> to vector<64xf32>
    %36 = vector.shape_cast %35 : vector<64xf32> to vector<64x1xf32>
    %37 = vector.broadcast %36 : vector<64x1xf32> to vector<64x64xf32>
    %38 = arith.subf %34, %37 : vector<64x64xf32>
    %39 = math.exp %38 : vector<64x64xf32>
    %cst_22 = arith.constant dense<0.000000e+00> : vector<64xf32>
    %40 = vector.multi_reduction <add>, %39, %cst_22 [1] : vector<64x64xf32> to vector<64xf32>
    %41 = vector.shape_cast %40 : vector<64xf32> to vector<64x1xf32>
    %42 = tpu.reciprocal %41 {approx = true} : vector<64x1xf32> -> vector<64x1xf32>
    %43 = arith.truncf %39 : vector<64x64xf32> to vector<64x64xbf16>
    %c0_23 = arith.constant 0 : index
    %c32_24 = arith.constant 32 : index
    %44 = vector.load %arg14[%c0_23, %c32_24] : memref<64x128xbf16, #tpu.memory_space<vmem>>, vector<64x32xbf16>
    %cst_25 = arith.constant dense<0.000000e+00> : vector<64x32xf32>
    %45 = tpu.matmul %43, %44, %cst_25 {dimension_numbers = #tpu.dot_dimension_numbers<[1], [0], [0], [1], [0, 0, 1, 1], [], []>} : vector<64x64xbf16>, vector<64x32xbf16>, vector<64x32xf32> -> vector<64x32xf32>
    %46 = vector.broadcast %42 : vector<64x1xf32> to vector<64x32xf32>
    %47 = arith.mulf %45, %46 : vector<64x32xf32>
    %c0_26 = arith.constant 0 : index
    %c32_27 = arith.constant 32 : index
    %48 = vector.load %arg12[%c0_26, %c32_27] : memref<64x128xf32, #tpu.memory_space<vmem>>, vector<64x32xf32>
    tpu.vector_store %arg12[%c0_26, %c32_27], %47 {strides = array<i32>} : memref<64x128xf32, #tpu.memory_space<vmem>>, vector<64x32xf32>,
    %49 = vector.extract_strided_slice %9 {offsets = [0, 64], sizes = [64, 32], strides = [1, 1]} : vector<64x128xbf16> to vector<64x32xbf16>
    %c0_28 = arith.constant 0 : index
    %c64 = arith.constant 64 : index
    %50 = vector.load %arg13[%c0_28, %c64] : memref<64x128xbf16, #tpu.memory_space<vmem>>, vector<64x32xbf16>
    %cst_29 = arith.constant dense<0.000000e+00> : vector<64x64xf32>
    %51 = tpu.matmul %49, %50, %cst_29 {dimension_numbers = #tpu.dot_dimension_numbers<[1], [1], [0], [0], [0, 0, 1, 0], [], []>} : vector<64x32xbf16>, vector<64x32xbf16>, vector<64x64xf32> -> vector<64x64xf32>
    %52 = arith.addf %51, %12 : vector<64x64xf32>
    %cst_30 = arith.constant dense<0xFF800000> : vector<64xf32>
    %53 = vector.multi_reduction <maximumf>, %52, %cst_30 [1] : vector<64x64xf32> to vector<64xf32>
    %54 = vector.shape_cast %53 : vector<64xf32> to vector<64x1xf32>
    %55 = vector.broadcast %54 : vector<64x1xf32> to vector<64x64xf32>
    %56 = arith.subf %52, %55 : vector<64x64xf32>
    %57 = math.exp %56 : vector<64x64xf32>
    %cst_31 = arith.constant dense<0.000000e+00> : vector<64xf32>
    %58 = vector.multi_reduction <add>, %57, %cst_31 [1] : vector<64x64xf32> to vector<64xf32>
    %59 = vector.shape_cast %58 : vector<64xf32> to vector<64x1xf32>
    %60 = tpu.reciprocal %59 {approx = true} : vector<64x1xf32> -> vector<64x1xf32>
    %61 = arith.truncf %57 : vector<64x64xf32> to vector<64x64xbf16>
    %c0_32 = arith.constant 0 : index
    %c64_33 = arith.constant 64 : index
    %62 = vector.load %arg14[%c0_32, %c64_33] : memref<64x128xbf16, #tpu.memory_space<vmem>>, vector<64x32xbf16>
    %cst_34 = arith.constant dense<0.000000e+00> : vector<64x32xf32>
    %63 = tpu.matmul %61, %62, %cst_34 {dimension_numbers = #tpu.dot_dimension_numbers<[1], [0], [0], [1], [0, 0, 1, 1], [], []>} : vector<64x64xbf16>, vector<64x32xbf16>, vector<64x32xf32> -> vector<64x32xf32>
    %64 = vector.broadcast %60 : vector<64x1xf32> to vector<64x32xf32>
    %65 = arith.mulf %63, %64 : vector<64x32xf32>
    %c0_35 = arith.constant 0 : index
    %c64_36 = arith.constant 64 : index
    %66 = vector.load %arg12[%c0_35, %c64_36] : memref<64x128xf32, #tpu.memory_space<vmem>>, vector<64x32xf32>
    tpu.vector_store %arg12[%c0_35, %c64_36], %65 {strides = array<i32>} : memref<64x128xf32, #tpu.memory_space<vmem>>, vector<64x32xf32>,
    %67 = vector.extract_strided_slice %9 {offsets = [0, 96], sizes = [64, 32], strides = [1, 1]} : vector<64x128xbf16> to vector<64x32xbf16>
    %c0_37 = arith.constant 0 : index
    %c96 = arith.constant 96 : index
    %68 = vector.load %arg13[%c0_37, %c96] : memref<64x128xbf16, #tpu.memory_space<vmem>>, vector<64x32xbf16>
    %cst_38 = arith.constant dense<0.000000e+00> : vector<64x64xf32>
    %69 = tpu.matmul %67, %68, %cst_38 {dimension_numbers = #tpu.dot_dimension_numbers<[1], [1], [0], [0], [0, 0, 1, 0], [], []>} : vector<64x32xbf16>, vector<64x32xbf16>, vector<64x64xf32> -> vector<64x64xf32>
    %70 = arith.addf %69, %12 : vector<64x64xf32>
    %cst_39 = arith.constant dense<0xFF800000> : vector<64xf32>
    %71 = vector.multi_reduction <maximumf>, %70, %cst_39 [1] : vector<64x64xf32> to vector<64xf32>
    %72 = vector.shape_cast %71 : vector<64xf32> to vector<64x1xf32>
    %73 = vector.broadcast %72 : vector<64x1xf32> to vector<64x64xf32>
    %74 = arith.subf %70, %73 : vector<64x64xf32>
    %75 = math.exp %74 : vector<64x64xf32>
    %cst_40 = arith.constant dense<0.000000e+00> : vector<64xf32>
    %76 = vector.multi_reduction <add>, %75, %cst_40 [1] : vector<64x64xf32> to vector<64xf32>
    %77 = vector.shape_cast %76 : vector<64xf32> to vector<64x1xf32>
    %78 = tpu.reciprocal %77 {approx = true} : vector<64x1xf32> -> vector<64x1xf32>
    %79 = arith.truncf %75 : vector<64x64xf32> to vector<64x64xbf16>
    %c0_41 = arith.constant 0 : index
    %c96_42 = arith.constant 96 : index
    %80 = vector.load %arg14[%c0_41, %c96_42] : memref<64x128xbf16, #tpu.memory_space<vmem>>, vector<64x32xbf16>
    %cst_43 = arith.constant dense<0.000000e+00> : vector<64x32xf32>
    %81 = tpu.matmul %79, %80, %cst_43 {dimension_numbers = #tpu.dot_dimension_numbers<[1], [0], [0], [1], [0, 0, 1, 1], [], []>} : vector<64x64xbf16>, vector<64x32xbf16>, vector<64x32xf32> -> vector<64x32xf32>
    %82 = vector.broadcast %78 : vector<64x1xf32> to vector<64x32xf32>
    %83 = arith.mulf %81, %82 : vector<64x32xf32>
    %c0_44 = arith.constant 0 : index
    %c96_45 = arith.constant 96 : index
    %84 = vector.load %arg12[%c0_44, %c96_45] : memref<64x128xf32, #tpu.memory_space<vmem>>, vector<64x32xf32>
    tpu.vector_store %arg12[%c0_44, %c96_45], %83 {strides = array<i32>} : memref<64x128xf32, #tpu.memory_space<vmem>>, vector<64x32xf32>,
    %c0_46 = arith.constant 0 : index
    %c0_47 = arith.constant 0 : index
    %85 = vector.load %arg12[%c0_46, %c0_47] : memref<64x128xf32, #tpu.memory_space<vmem>>, vector<64x128xf32>
    %86 = arith.truncf %85 : vector<64x128xf32> to vector<64x128xbf16>
    %c0_48 = arith.constant 0 : index
    %c0_49 = arith.constant 0 : index
    %87 = vector.load %arg9[%c0_48, %c0_49] : memref<128x128xbf16, #tpu.memory_space<vmem>>, vector<128x128xbf16>
    %cst_50 = arith.constant dense<0.000000e+00> : vector<64x128xf32>
    %88 = tpu.matmul %86, %87, %cst_50 {dimension_numbers = #tpu.dot_dimension_numbers<[1], [0], [0], [1], [0, 0, 1, 1], [], []>} : vector<64x128xbf16>, vector<128x128xbf16>, vector<64x128xf32> -> vector<64x128xf32>
    %c0_51 = arith.constant 0 : index
    %c0_52 = arith.constant 0 : index
    %89 = vector.load %arg10[%c0_51, %c0_52] : memref<1x128xf32, #tpu.memory_space<vmem>>, vector<1x128xf32>
    %90 = vector.broadcast %89 : vector<1x128xf32> to vector<64x128xf32>
    %91 = arith.addf %88, %90 : vector<64x128xf32>
    %c0_53 = arith.constant 0 : index
    %c0_54 = arith.constant 0 : index
    %c0_55 = arith.constant 0 : index
    %92 = vector.load %arg11[%c0_53, %c0_54, %c0_55] : memref<1x64x128xf32, #tpu.memory_space<vmem>>, vector<1x64x128xf32>
    %93 = vector.shape_cast %92 : vector<1x64x128xf32> to vector<64x128xf32>
    %94 = vector.shape_cast %91 : vector<64x128xf32> to vector<1x64x128xf32>
    tpu.vector_store %arg11[%c0_53, %c0_54, %c0_55], %94 {strides = array<i32>} : memref<1x64x128xf32, #tpu.memory_space<vmem>>, vector<1x64x128xf32>,
    return
  }
  func.func @transform_0(%arg0: i32, %arg1: i32) -> (i32, i32, i32) {
    %c0_i32 = arith.constant 0 : i32
    %c0_i32_0 = arith.constant 0 : i32
    return %arg0, %arg1, %c0_i32 : i32, i32, i32
  }
  func.func @transform_1(%arg0: i32, %arg1: i32) -> (i32, i32, i32) {
    %c0_i32 = arith.constant 0 : i32
    %c0_i32_0 = arith.constant 0 : i32
    %c0_i32_1 = arith.constant 0 : i32
    return %arg0, %c0_i32, %c0_i32_0 : i32, i32, i32
  }
  func.func @transform_2(%arg0: i32, %arg1: i32) -> (i32, i32, i32) {
    %c0_i32 = arith.constant 0 : i32
    %c0_i32_0 = arith.constant 0 : i32
    %c0_i32_1 = arith.constant 0 : i32
    return %arg0, %c0_i32, %c0_i32_0 : i32, i32, i32
  }
  func.func @transform_3(%arg0: i32, %arg1: i32) -> (i32, i32, i32) {
    %c0_i32 = arith.constant 0 : i32
    %c0_i32_0 = arith.constant 0 : i32
    return %arg0, %arg1, %c0_i32 : i32, i32, i32
  }
  func.func @transform_4(%arg0: i32, %arg1: i32) -> (i32, i32) {
    %c0_i32 = arith.constant 0 : i32
    %c0_i32_0 = arith.constant 0 : i32
    %c0_i32_1 = arith.constant 0 : i32
    return %c0_i32, %c0_i32_0 : i32, i32
  }
  func.func @transform_5(%arg0: i32, %arg1: i32) -> (i32, i32) {
    %c0_i32 = arith.constant 0 : i32
    %c0_i32_0 = arith.constant 0 : i32
    %c0_i32_1 = arith.constant 0 : i32
    return %c0_i32, %c0_i32_0 : i32, i32
  }
  func.func @transform_6(%arg0: i32, %arg1: i32) -> (i32, i32) {
    %c0_i32 = arith.constant 0 : i32
    %c0_i32_0 = arith.constant 0 : i32
    %c0_i32_1 = arith.constant 0 : i32
    return %c0_i32, %c0_i32_0 : i32, i32
  }
  func.func @transform_7(%arg0: i32, %arg1: i32) -> (i32, i32) {
    %c0_i32 = arith.constant 0 : i32
    %c0_i32_0 = arith.constant 0 : i32
    %c0_i32_1 = arith.constant 0 : i32
    return %c0_i32, %c0_i32_0 : i32, i32
  }
  func.func @transform_8(%arg0: i32, %arg1: i32) -> (i32, i32) {
    %c0_i32 = arith.constant 0 : i32
    %c0_i32_0 = arith.constant 0 : i32
    %c0_i32_1 = arith.constant 0 : i32
    return %c0_i32, %c0_i32_0 : i32, i32
  }
  func.func @transform_9(%arg0: i32, %arg1: i32) -> (i32, i32, i32) {
    %c0_i32 = arith.constant 0 : i32
    %c0_i32_0 = arith.constant 0 : i32
    return %arg0, %arg1, %c0_i32 : i32, i32, i32
  }
}

</mosaic_0001>

<llo_original>
// kernel: tpu_custom_call.1
$region0: #{tpu_custom_call.1}
  #allocation0 [shape = 'u32[]', space=smem, size = 0x4, offset = 0x4, fixed_abs, tag = 'smem constant byte address 0x4 - core index']
  #allocation1 [shape = 'u32[144,128]{1,0:T(1,128)}', space=vmem, size = 0x12000, scoped, tag = 'internal scratch']
  #allocation2 [shape = 'f32[64,128]{1,0:T(8,128)}', space=vmem, size = 0x8000, scoped, tag = 'scratch operand']
  #allocation3 [shape = 'bf16[64,128]{1,0:T(8,128)(2,1)}', space=vmem, size = 0x4000, scoped, tag = 'scratch operand']
  #allocation4 [shape = 'bf16[64,128]{1,0:T(8,128)(2,1)}', space=vmem, size = 0x4000, scoped, tag = 'scratch operand']
  %s0 = inlined_call_operand.vmem [shape: bf16[2,128,128], index: 0, kind: input, shape index: {}]
  %s1 = inlined_call_operand.vmem [shape: bf16[2,64,128], index: 1, kind: input, shape index: {}]
  %s2 = inlined_call_operand.hbm [shape: bf16[2,64,128], index: 2, kind: input, shape index: {}]
  %s3 = inlined_call_operand.vmem [shape: bf16[2,128,64], index: 3, kind: input, shape index: {}]
  %s4 = inlined_call_operand.hbm [shape: bf16[128,128], index: 4, kind: input, shape index: {}]
  %s5 = inlined_call_operand.hbm [shape: bf16[128,128], index: 5, kind: input, shape index: {}]
  %s6 = inlined_call_operand.hbm [shape: bf16[128,128], index: 6, kind: input, shape index: {}]
  %s7 = inlined_call_operand.hbm [shape: bf16[128,128], index: 7, kind: input, shape index: {}]
  %s8 = inlined_call_operand.vmem [shape: f32[1,128], index: 8, kind: input, shape index: {}]
  %s9 = inlined_call_operand.hbm [shape: f32[2,128,128], index: 9, kind: output, shape index: {}]
  %s10 = sld [smem:[#allocation0]]
  $region93: #{tpu_custom_call.1} parent=0
    _
  %s12 = ssub.s32 1, %s10
  %s13 = scalar_select 0, %s12, %s10
  $region1: #{tpu_custom_call.1} parent=0
    #allocation5 [shape = 'u8[16384]{0}', space=vmem, size = 0x4000, scoped, tag = 'input window, operand 2, single buffered']
    #allocation6 [shape = 's32[2]{0}', space=sflag, size = 0x8, scoped, tag = 'scoped memory for tpu_custom_call.1']
    #allocation7 [shape = 's32[2]{0}', space=sflag, size = 0x8, scoped, tag = 'scoped memory for tpu_custom_call.1']
    #allocation8 [shape = 'u8[32768]{0}', space=vmem, size = 0x8000, scoped, tag = 'input window, operand 4, single buffered']
    #allocation9 [shape = 's32[1]{0}', space=sflag, size = 0x4, scoped, tag = 'scoped memory for tpu_custom_call.1']
    #allocation10 [shape = 'u8[32768]{0}', space=vmem, size = 0x8000, scoped, tag = 'input window, operand 5, single buffered']
    #allocation11 [shape = 'u8[32768]{0}', space=vmem, size = 0x8000, scoped, tag = 'input window, operand 6, single buffered']
    #allocation12 [shape = 's32[1]{0}', space=sflag, size = 0x4, scoped, tag = 'scoped memory for tpu_custom_call.1']
    #allocation13 [shape = 'u8[32768]{0}', space=vmem, size = 0x8000, scoped, tag = 'input window, operand 7, single buffered']
    #allocation14 [shape = 'u8[65536]{0}', space=vmem, size = 0x10000, scoped, tag = 'output window, operand 0']
    %14 = vsyncpa [#allocation6], 0
    %15 = vsyncpa [#allocation9], 0
    %16 = vsyncpa [#allocation12], 0
    %17 = vsyncpa [#allocation7], 0
    %s18 = scalar_lea.sflag [#allocation7], 1
    %19 = vsyncpa %s18, 0
    loop: start=0, step=1, limit=6
    $region2: #{tpu_custom_call.1} parent=1 // loop_pre_header
      _
    $region3: #{tpu_custom_call.1} parent=1 // loop_header
      %s21 = sphi 0, %s25
      %p22 = scmp.ge.s32.totalorder %s21, 6
      %s28 = sphi 0, %s40
      %s29 = sphi 0, %s36
      %s30 = sphi 0, %s28
      %s31 = sphi 0, %s29
      %s32 = sphi 0, %s30
      %s33 = sphi 0, %s31
      %s45 = sphi 0, %s47
      %s48 = sphi 0, %s45
      %s49 = sphi 0, %s48
      %s65 = sphi 0, %s49
      %s71 = sphi 0, %s73
      %s74 = sphi 0, %s71
      %s75 = sphi 0, %s74
      %s91 = sphi 0, %s75
      %s97 = sphi 0, %s99
      %s100 = sphi 0, %s97
      %s101 = sphi 0, %s100
      %s117 = sphi 0, %s101
      %s125 = sphi 0, %s127
      %s128 = sphi 0, %s125
      %s129 = sphi 0, %s128
      %s145 = sphi 0, %s129
      %s149 = sphi 0, %s149
      %s151 = sphi 0, %s149
      %s152 = sphi 0, %s151
      %s166 = sphi 0, %s152
      %s170 = sphi 0, %s170
      %s172 = sphi 0, %s170
      %s173 = sphi 0, %s172
      %s187 = sphi 0, %s173
      %s191 = sphi 0, %s191
      %s193 = sphi 0, %s191
      %s194 = sphi 0, %s193
      %s208 = sphi 0, %s194
      %s212 = sphi 0, %s212
      %s214 = sphi 0, %s212
      %s215 = sphi 0, %s214
      %s229 = sphi 0, %s215
      %s233 = sphi 0, %s233
      %s235 = sphi 0, %s233
      %s236 = sphi 0, %s235
      %s250 = sphi 0, %s236
      %s258 = sphi 0, %s260
      %s261 = sphi 0, %s258
      %s262 = sphi 0, %s261
      %s278 = sphi 0, %s262
    $region4: #{tpu_custom_call.1} parent=1 // loop_header_branch
      %24 = sbr.rel (%p22) target = $region8
    $region5: #{tpu_custom_call.1} parent=1 // loop_body
      %s26 = ssub.s32 %s21, 1
      %s27 = ssub.s32 %s21, 2
      %s34 = sadd.s32 1, %s29
      %p35 = scmp.ge.s32.totalorder %s34, 2
      %s36 = scalar_select %p35, 0, %s34
      %s37 = sadd.s32 1, %s28
      %s38 = scalar_select %p35, %s37, %s28
      %p39 = scmp.ge.s32.totalorder %s38, 2
      %s40 = scalar_select %p39, 0, %s38
      %s41 = ssub.s32 %s28, %s40
      %s42 = ssub.s32 %s29, %s36
      %s43 = sor.u32 %s41, %s42
      %p44 = scmp.eq.s32.totalorder %s43, 0
      %s46 = sadd.s32 %s45, 1
      %s47 = scalar_select %p44, %s45, %s46
      %p50 = pneg %p44
      %p51 = scmp.eq.s32.totalorder %s21, 3
      %p52 = por %p50, %p51
      %p53 = scmp.ne.s32.totalorder %s45, %s48
      %p54 = scmp.eq.s32.totalorder %s21, 0
      %p55 = por %p53, %p54
      %p56 = scmp.ne.s32.totalorder %s45, %s48
      %p57 = scmp.eq.s32.totalorder %s26, 3
      %p58 = por %p56, %p57
      %p59 = scmp.ne.s32.totalorder %s48, %s49
      %p60 = scmp.eq.s32.totalorder %s26, 0
      %p61 = por %p59, %p60
      %p62 = scmp.ne.s32.totalorder %s48, %s49
      %p63 = scmp.eq.s32.totalorder %s27, 3
      %p64 = por %p62, %p63
      %p66 = scmp.ne.s32.totalorder %s49, %s65
      %p67 = scmp.eq.s32.totalorder %s27, 0
      %p68 = por %p66, %p67
      %s69 = ssub.s32 %s28, %s40
      %p70 = scmp.eq.s32.totalorder %s69, 0
      %s72 = sadd.s32 %s71, 1
      %s73 = scalar_select %p70, %s71, %s72
      %p76 = pneg %p70
      %p77 = scmp.eq.s32.totalorder %s21, 3
      %p78 = por %p76, %p77
      %p79 = scmp.ne.s32.totalorder %s71, %s74
      %p80 = scmp.eq.s32.totalorder %s21, 0
      %p81 = por %p79, %p80
      %p82 = scmp.ne.s32.totalorder %s71, %s74
      %p83 = scmp.eq.s32.totalorder %s26, 3
      %p84 = por %p82, %p83
      %p85 = scmp.ne.s32.totalorder %s74, %s75
      %p86 = scmp.eq.s32.totalorder %s26, 0
      %p87 = por %p85, %p86
      %p88 = scmp.ne.s32.totalorder %s74, %s75
      %p89 = scmp.eq.s32.totalorder %s27, 3
      %p90 = por %p88, %p89
      %p92 = scmp.ne.s32.totalorder %s75, %s91
      %p93 = scmp.eq.s32.totalorder %s27, 0
      %p94 = por %p92, %p93
      %s95 = ssub.s32 %s28, %s40
      %p96 = scmp.eq.s32.totalorder %s95, 0
      %s98 = sadd.s32 %s97, 1
      %s99 = scalar_select %p96, %s97, %s98
      %p102 = pneg %p96
      %p103 = scmp.eq.s32.totalorder %s21, 3
      %p104 = por %p102, %p103
      %p105 = scmp.ne.s32.totalorder %s97, %s100
      %p106 = scmp.eq.s32.totalorder %s21, 0
      %p107 = por %p105, %p106
      %p108 = scmp.ne.s32.totalorder %s97, %s100
      %p109 = scmp.eq.s32.totalorder %s26, 3
      %p110 = por %p108, %p109
      %p111 = scmp.ne.s32.totalorder %s100, %s101
      %p112 = scmp.eq.s32.totalorder %s26, 0
      %p113 = por %p111, %p112
      %p114 = scmp.ne.s32.totalorder %s100, %s101
      %p115 = scmp.eq.s32.totalorder %s27, 3
      %p116 = por %p114, %p115
      %p118 = scmp.ne.s32.totalorder %s101, %s117
      %p119 = scmp.eq.s32.totalorder %s27, 0
      %p120 = por %p118, %p119
      %s121 = ssub.s32 %s28, %s40
      %s122 = ssub.s32 %s29, %s36
      %s123 = sor.u32 %s121, %s122
      %p124 = scmp.eq.s32.totalorder %s123, 0
      %s126 = sadd.s32 %s125, 1
      %s127 = scalar_select %p124, %s125, %s126
      %p130 = pneg %p124
      %p131 = scmp.eq.s32.totalorder %s21, 3
      %p132 = por %p130, %p131
      %p133 = scmp.ne.s32.totalorder %s125, %s128
      %p134 = scmp.eq.s32.totalorder %s21, 0
      %p135 = por %p133, %p134
      %p136 = scmp.ne.s32.totalorder %s125, %s128
      %p137 = scmp.eq.s32.totalorder %s26, 3
      %p138 = por %p136, %p137
      %p139 = scmp.ne.s32.totalorder %s128, %s129
      %p140 = scmp.eq.s32.totalorder %s26, 0
      %p141 = por %p139, %p140
      %p142 = scmp.ne.s32.totalorder %s128, %s129
      %p143 = scmp.eq.s32.totalorder %s27, 3
      %p144 = por %p142, %p143
      %p146 = scmp.ne.s32.totalorder %s129, %s145
      %p147 = scmp.eq.s32.totalorder %s27, 0
      %p148 = por %p146, %p147
      %s150 = sadd.s32 %s149, 1
      %p153 = scmp.eq.s32.totalorder %s21, 3
      %p154 = scmp.ne.s32.totalorder %s149, %s151
      %p155 = scmp.eq.s32.totalorder %s21, 0
      %p156 = por %p154, %p155
      %p157 = scmp.ne.s32.totalorder %s149, %s151
      %p158 = scmp.eq.s32.totalorder %s26, 3
      %p159 = por %p157, %p158
      %p160 = scmp.ne.s32.totalorder %s151, %s152
      %p161 = scmp.eq.s32.totalorder %s26, 0
      %p162 = por %p160, %p161
      %p163 = scmp.ne.s32.totalorder %s151, %s152
      %p164 = scmp.eq.s32.totalorder %s27, 3
      %p165 = por %p163, %p164
      %p167 = scmp.ne.s32.totalorder %s152, %s166
      %p168 = scmp.eq.s32.totalorder %s27, 0
      %p169 = por %p167, %p168
      %s171 = sadd.s32 %s170, 1
      %p174 = scmp.eq.s32.totalorder %s21, 3
      %p175 = scmp.ne.s32.totalorder %s170, %s172
      %p176 = scmp.eq.s32.totalorder %s21, 0
      %p177 = por %p175, %p176
      %p178 = scmp.ne.s32.totalorder %s170, %s172
      %p179 = scmp.eq.s32.totalorder %s26, 3
      %p180 = por %p178, %p179
      %p181 = scmp.ne.s32.totalorder %s172, %s173
      %p182 = scmp.eq.s32.totalorder %s26, 0
      %p183 = por %p181, %p182
      %p184 = scmp.ne.s32.totalorder %s172, %s173
      %p185 = scmp.eq.s32.totalorder %s27, 3
      %p186 = por %p184, %p185
      %p188 = scmp.ne.s32.totalorder %s173, %s187
      %p189 = scmp.eq.s32.totalorder %s27, 0
      %p190 = por %p188, %p189
      %s192 = sadd.s32 %s191, 1
      %p195 = scmp.eq.s32.totalorder %s21, 3
      %p196 = scmp.ne.s32.totalorder %s191, %s193
      %p197 = scmp.eq.s32.totalorder %s21, 0
      %p198 = por %p196, %p197
      %p199 = scmp.ne.s32.totalorder %s191, %s193
      %p200 = scmp.eq.s32.totalorder %s26, 3
      %p201 = por %p199, %p200
      %p202 = scmp.ne.s32.totalorder %s193, %s194
      %p203 = scmp.eq.s32.totalorder %s26, 0
      %p204 = por %p202, %p203
      %p205 = scmp.ne.s32.totalorder %s193, %s194
      %p206 = scmp.eq.s32.totalorder %s27, 3
      %p207 = por %p205, %p206
      %p209 = scmp.ne.s32.totalorder %s194, %s208
      %p210 = scmp.eq.s32.totalorder %s27, 0
      %p211 = por %p209, %p210
      %s213 = sadd.s32 %s212, 1
      %p216 = scmp.eq.s32.totalorder %s21, 3
      %p217 = scmp.ne.s32.totalorder %s212, %s214
      %p218 = scmp.eq.s32.totalorder %s21, 0
      %p219 = por %p217, %p218
      %p220 = scmp.ne.s32.totalorder %s212, %s214
      %p221 = scmp.eq.s32.totalorder %s26, 3
      %p222 = por %p220, %p221
      %p223 = scmp.ne.s32.totalorder %s214, %s215
      %p224 = scmp.eq.s32.totalorder %s26, 0
      %p225 = por %p223, %p224
      %p226 = scmp.ne.s32.totalorder %s214, %s215
      %p227 = scmp.eq.s32.totalorder %s27, 3
      %p228 = por %p226, %p227
      %p230 = scmp.ne.s32.totalorder %s215, %s229
      %p231 = scmp.eq.s32.totalorder %s27, 0
      %p232 = por %p230, %p231
      %s234 = sadd.s32 %s233, 1
      %p237 = scmp.eq.s32.totalorder %s21, 3
      %p238 = scmp.ne.s32.totalorder %s233, %s235
      %p239 = scmp.eq.s32.totalorder %s21, 0
      %p240 = por %p238, %p239
      %p241 = scmp.ne.s32.totalorder %s233, %s235
      %p242 = scmp.eq.s32.totalorder %s26, 3
      %p243 = por %p241, %p242
      %p244 = scmp.ne.s32.totalorder %s235, %s236
      %p245 = scmp.eq.s32.totalorder %s26, 0
      %p246 = por %p244, %p245
      %p247 = scmp.ne.s32.totalorder %s235, %s236
      %p248 = scmp.eq.s32.totalorder %s27, 3
      %p249 = por %p247, %p248
      %p251 = scmp.ne.s32.totalorder %s236, %s250
      %p252 = scmp.eq.s32.totalorder %s27, 0
      %p253 = por %p251, %p252
      %s254 = ssub.s32 %s28, %s40
      %s255 = ssub.s32 %s29, %s36
      %s256 = sor.u32 %s254, %s255
      %p257 = scmp.eq.s32.totalorder %s256, 0
      %s259 = sadd.s32 %s258, 1
      %s260 = scalar_select %p257, %s258, %s259
      %p263 = pneg %p257
      %p264 = scmp.eq.s32.totalorder %s21, 3
      %p265 = por %p263, %p264
      %p266 = scmp.ne.s32.totalorder %s258, %s261
      %p267 = scmp.eq.s32.totalorder %s21, 0
      %p268 = por %p266, %p267
      %p269 = scmp.ne.s32.totalorder %s258, %s261
      %p270 = scmp.eq.s32.totalorder %s26, 3
      %p271 = por %p269, %p270
      %p272 = scmp.ne.s32.totalorder %s261, %s262
      %p273 = scmp.eq.s32.totalorder %s26, 0
      %p274 = por %p272, %p273
      %p275 = scmp.ne.s32.totalorder %s261, %s262
      %p276 = scmp.eq.s32.totalorder %s27, 3
      %p277 = por %p275, %p276
      %p279 = scmp.ne.s32.totalorder %s262, %s278
      %p280 = scmp.eq.s32.totalorder %s27, 0
      %p281 = por %p279, %p280
      %p282 = scmp.le.s32.totalorder 1, %s21
      %p283 = scmp.lt.s32.totalorder %s21, 5
      %p284 = pnand %p282, %p283
      %p285 = pneg %p284
      // Predicated region
      $region9: #{tpu_custom_call.1} parent=5 // pred_check
        _
      $region10: #{tpu_custom_call.1} parent=5 // pred_check_branch
        %287 = sbr.rel (%p284) target = $region12
      $region11: #{tpu_custom_call.1} parent=5 // pred_region
        %s288 = ssub.s32 %s21, 1
        // Predicated region
        $region13: #{tpu_custom_call.1} parent=11 // pred_check
          %p289 = pneg %p87
        $region14: #{tpu_custom_call.1} parent=11 // pred_check_branch
          %291 = sbr.rel (%p289) target = $region16
        $region15: #{tpu_custom_call.1} parent=11 // pred_region
          %p292 = scmp.lt.s32.totalorder %s30, 1
          %s293 = scalar_select %p292, %s30, 1
          %s294 = smul.addr %s293, 8
          %s295 = smul.addr %s294, 4
          %s296 = scalar_lea.vmem %s1, %s295
        $region16: #{tpu_custom_call.1} parent=11 // pred_fallthru
          _
        // Predicated region
        $region17: #{tpu_custom_call.1} parent=11 // pred_check
          %p297 = pneg %p113
        $region18: #{tpu_custom_call.1} parent=11 // pred_check_branch
          %299 = sbr.rel (%p297) target = $region20
        $region19: #{tpu_custom_call.1} parent=11 // pred_region
          %s301 = ssub.s32 512, 512
          %302 = vsyncadd [#allocation6], %s301
          %s303 = smul.addr %s30, 8
          %s304 = smul.addr %s303, 64
          %s305 = scalar_lea.hbm %s2, %s304
          %s306 = sshll.u32 [#allocation5], 4
          %s307 = int_to_ptr.vmem [resolvable:$true] %s306
          %312 = dma.hbm_to_vmem [thread:$0]  %s305, 512, %s307, [#allocation6], 64, 64, 4
        $region20: #{tpu_custom_call.1} parent=11 // pred_fallthru
          _
        // Predicated region
        $region21: #{tpu_custom_call.1} parent=11 // pred_check
          %p313 = pneg %p162
        $region22: #{tpu_custom_call.1} parent=11 // pred_check_branch
          %315 = sbr.rel (%p313) target = $region24
        $region23: #{tpu_custom_call.1} parent=11 // pred_region
          %s317 = ssub.s32 1024, 1024
          %318 = vsyncadd [#allocation9], %s317
          %s319 = sshll.u32 [#allocation8], 4
          %s320 = int_to_ptr.vmem [resolvable:$true] %s319
          %325 = dma.hbm_to_vmem [thread:$0]  %s4, 1024, %s320, [#allocation9], 64, 64, 4
        $region24: #{tpu_custom_call.1} parent=11 // pred_fallthru
          _
        // Predicated region
        $region25: #{tpu_custom_call.1} parent=11 // pred_check
          %p326 = pneg %p183
        $region26: #{tpu_custom_call.1} parent=11 // pred_check_branch
          %328 = sbr.rel (%p326) target = $region28
        $region27: #{tpu_custom_call.1} parent=11 // pred_region
          %s330 = ssub.s32 1024, 1024
          %331 = vsyncadd [#allocation9], %s330
          %s332 = sshll.u32 [#allocation10], 4
          %s333 = int_to_ptr.vmem [resolvable:$true] %s332
          %338 = dma.hbm_to_vmem [thread:$0]  %s5, 1024, %s333, [#allocation9], 64, 64, 4
        $region28: #{tpu_custom_call.1} parent=11 // pred_fallthru
          _
        // Predicated region
        $region29: #{tpu_custom_call.1} parent=11 // pred_check
          %p339 = pneg %p204
        $region30: #{tpu_custom_call.1} parent=11 // pred_check_branch
          %341 = sbr.rel (%p339) target = $region32
        $region31: #{tpu_custom_call.1} parent=11 // pred_region
          %s343 = ssub.s32 1024, 1024
          %344 = vsyncadd [#allocation12], %s343
          %s345 = sshll.u32 [#allocation11], 4
          %s346 = int_to_ptr.vmem [resolvable:$true] %s345
          %351 = dma.hbm_to_vmem [thread:$0]  %s6, 1024, %s346, [#allocation12], 64, 64, 4
        $region32: #{tpu_custom_call.1} parent=11 // pred_fallthru
          _
        // Predicated region
        $region33: #{tpu_custom_call.1} parent=11 // pred_check
          %p352 = pneg %p225
        $region34: #{tpu_custom_call.1} parent=11 // pred_check_branch
          %354 = sbr.rel (%p352) target = $region36
        $region35: #{tpu_custom_call.1} parent=11 // pred_region
          %s356 = ssub.s32 1024, 1024
          %357 = vsyncadd [#allocation12], %s356
          %s358 = sshll.u32 [#allocation13], 4
          %s359 = int_to_ptr.vmem [resolvable:$true] %s358
          %364 = dma.hbm_to_vmem [thread:$0]  %s7, 1024, %s359, [#allocation12], 64, 64, 4
        $region36: #{tpu_custom_call.1} parent=11 // pred_fallthru
          _
        // Predicated region
        $region37: #{tpu_custom_call.1} parent=11 // pred_check
          %p365 = pneg %p246
        $region38: #{tpu_custom_call.1} parent=11 // pred_check_branch
          %367 = sbr.rel (%p365) target = $region40
        $region39: #{tpu_custom_call.1} parent=11 // pred_region
          _
        $region40: #{tpu_custom_call.1} parent=11 // pred_fallthru
          _
      $region12: #{tpu_custom_call.1} parent=5 // pred_fallthru
        _
      %p368 = scmp.lt.s32.totalorder %s21, 4
      // Predicated region
      $region41: #{tpu_custom_call.1} parent=5 // pred_check
        %p369 = pneg %p368
      $region42: #{tpu_custom_call.1} parent=5 // pred_check_branch
        %371 = sbr.rel (%p369) target = $region44
      $region43: #{tpu_custom_call.1} parent=5 // pred_region
        // Predicated region
        $region45: #{tpu_custom_call.1} parent=43 // pred_check
          %p372 = pneg %p55
        $region46: #{tpu_custom_call.1} parent=43 // pred_check_branch
          %374 = sbr.rel (%p372) target = $region48
        $region47: #{tpu_custom_call.1} parent=43 // pred_region
          %s375 = smul.u32 8, %s29
          %p376 = scmp.lt.s32.totalorder %s28, 1
          %s377 = scalar_select %p376, %s28, 1
          %p378 = scmp.lt.s32.totalorder %s375, 15
          %s379 = scalar_select %p378, %s375, 15
          %s380 = smul.addr %s377, 16
          %s381 = sadd.s32 %s379, %s380
          %s382 = smul.addr %s381, 4
          %s383 = scalar_lea.vmem %s0, %s382
          %s384 = smul.u32 8, %s29
        $region48: #{tpu_custom_call.1} parent=43 // pred_fallthru
          _
        // Predicated region
        $region49: #{tpu_custom_call.1} parent=43 // pred_check
          %p385 = pneg %p135
        $region50: #{tpu_custom_call.1} parent=43 // pred_check_branch
          %387 = sbr.rel (%p385) target = $region52
        $region51: #{tpu_custom_call.1} parent=43 // pred_region
          %s388 = smul.u32 8, %s29
          %p389 = scmp.lt.s32.totalorder %s28, 1
          %s390 = scalar_select %p389, %s28, 1
          %p391 = scmp.lt.s32.totalorder %s388, 15
          %s392 = scalar_select %p391, %s388, 15
          %s393 = smul.addr %s390, 16
          %s394 = sadd.s32 %s392, %s393
          %s395 = smul.addr %s394, 4
          %s396 = scalar_lea.vmem %s3, %s395
          %s397 = smul.u32 8, %s29
        $region52: #{tpu_custom_call.1} parent=43 // pred_fallthru
          _
      $region44: #{tpu_custom_call.1} parent=5 // pred_fallthru
        _
      %p398 = scmp.le.s32.totalorder 1, %s21
      %p399 = scmp.lt.s32.totalorder %s21, 5
      %p400 = pnand %p398, %p399
      %p401 = pneg %p400
      // Predicated region
      $region53: #{tpu_custom_call.1} parent=5 // pred_check
        _
      $region54: #{tpu_custom_call.1} parent=5 // pred_check_branch
        %403 = sbr.rel (%p400) target = $region56
      $region55: #{tpu_custom_call.1} parent=5 // pred_region
        %s404 = ssub.s32 %s21, 1
        // Predicated region
        $region57: #{tpu_custom_call.1} parent=55 // pred_check
          %p405 = pneg %p113
        $region58: #{tpu_custom_call.1} parent=55 // pred_check_branch
          %407 = sbr.rel (%p405) target = $region60
        $region59: #{tpu_custom_call.1} parent=55 // pred_region
          %408 = dma.done [#allocation6], 512
        $region60: #{tpu_custom_call.1} parent=55 // pred_fallthru
          _
        // Predicated region
        $region61: #{tpu_custom_call.1} parent=55 // pred_check
          %p409 = pneg %p162
        $region62: #{tpu_custom_call.1} parent=55 // pred_check_branch
          %411 = sbr.rel (%p409) target = $region64
        $region63: #{tpu_custom_call.1} parent=55 // pred_region
          %412 = dma.done [#allocation9], 1024
        $region64: #{tpu_custom_call.1} parent=55 // pred_fallthru
          _
        // Predicated region
        $region65: #{tpu_custom_call.1} parent=55 // pred_check
          %p413 = pneg %p183
        $region66: #{tpu_custom_call.1} parent=55 // pred_check_branch
          %415 = sbr.rel (%p413) target = $region68
        $region67: #{tpu_custom_call.1} parent=55 // pred_region
          %416 = dma.done [#allocation9], 1024
        $region68: #{tpu_custom_call.1} parent=55 // pred_fallthru
          _
        // Predicated region
        $region69: #{tpu_custom_call.1} parent=55 // pred_check
          %p417 = pneg %p204
        $region70: #{tpu_custom_call.1} parent=55 // pred_check_branch
          %419 = sbr.rel (%p417) target = $region72
        $region71: #{tpu_custom_call.1} parent=55 // pred_region
          %420 = dma.done [#allocation12], 1024
        $region72: #{tpu_custom_call.1} parent=55 // pred_fallthru
          _
        // Predicated region
        $region73: #{tpu_custom_call.1} parent=55 // pred_check
          %p421 = pneg %p225
        $region74: #{tpu_custom_call.1} parent=55 // pred_check_branch
          %423 = sbr.rel (%p421) target = $region76
        $region75: #{tpu_custom_call.1} parent=55 // pred_region
          %424 = dma.done [#allocation12], 1024
        $region76: #{tpu_custom_call.1} parent=55 // pred_fallthru
          _
        %s425 = smul.u32 8, %s31
        %p426 = scmp.lt.s32.totalorder %s30, 1
        %s427 = scalar_select %p426, %s30, 1
        %p428 = scmp.lt.s32.totalorder %s425, 15
        %s429 = scalar_select %p428, %s425, 15
        %s430 = smul.addr %s427, 16
        %s431 = sadd.s32 %s429, %s430
        %s432 = smul.addr %s431, 4
        %s433 = scalar_lea.vmem %s0, %s432
        %p434 = pneg %p61
        %p435 = pneg %p58
        %p436 = scmp.lt.s32.totalorder %s30, 1
        %s437 = scalar_select %p436, %s30, 1
        %s438 = smul.addr %s437, 8
        %s439 = smul.addr %s438, 4
        %s440 = scalar_lea.vmem %s1, %s439
        %p441 = pneg %p87
        %p442 = pneg %p84
        %p443 = pneg %p113
        %p444 = pneg %p110
        %s445 = smul.u32 8, %s31
        %p446 = scmp.lt.s32.totalorder %s30, 1
        %s447 = scalar_select %p446, %s30, 1
        %p448 = scmp.lt.s32.totalorder %s445, 15
        %s449 = scalar_select %p448, %s445, 15
        %s450 = smul.addr %s447, 16
        %s451 = sadd.s32 %s449, %s450
        %s452 = smul.addr %s451, 4
        %s453 = scalar_lea.vmem %s3, %s452
        %p454 = pneg %p141
        %p455 = pneg %p138
        %p456 = pneg %p162
        %p457 = pneg %p159
        %p458 = pneg %p183
        %p459 = pneg %p180
        %p460 = pneg %p204
        %p461 = pneg %p201
        %p462 = pneg %p225
        %p463 = pneg %p222
        %p464 = pneg %p246
        %p465 = pneg %p243
        %p466 = pneg %p274
        %p467 = pneg %p271
        %s468 = sand.u32 %s261, 1
        %s469 = scalar_lea.sflag [#allocation7], %s468
        %s470 = sand.u32 %s261, 1
        %s471 = smul.addr %s470, 64
        %s472 = scalar_lea.vmem [#allocation14], %s471
        %s473 = smul.u32 8, %s31
        %p474 = scmp.lt.s32.totalorder %s30, 1
        %s475 = scalar_select %p474, %s30, 1
        %p476 = scmp.lt.s32.totalorder %s473, 15
        %s477 = scalar_select %p476, %s473, 15
        %s478 = smul.addr %s475, 16
        %s479 = sadd.s32 %s477, %s478
        %s480 = smul.addr %s479, 4
        %s481 = scalar_lea.vmem %s0, %s480
        %s482 = smul.u32 8, %s31
        %p483 = scmp.lt.s32.totalorder %s30, 1
        %s484 = scalar_select %p483, %s30, 1
        %s485 = smul.addr %s484, 8
        %s486 = smul.addr %s485, 4
        %s487 = scalar_lea.vmem %s1, %s486
        %s488 = smul.u32 8, %s31
        %p489 = scmp.lt.s32.totalorder %s30, 1
        %s490 = scalar_select %p489, %s30, 1
        %p491 = scmp.lt.s32.totalorder %s488, 15
        %s492 = scalar_select %p491, %s488, 15
        %s493 = smul.addr %s490, 16
        %s494 = sadd.s32 %s492, %s493
        %s495 = smul.addr %s494, 4
        %s496 = scalar_lea.vmem %s3, %s495
        %s497 = smul.u32 8, %s31
        %s498 = smul.u32 8, %s31
        %p500 = scmp.eq.s32.totalorder %s31, 0
        // Predicated region
        $region77: #{tpu_custom_call.1} parent=55 // pred_check
          %p501 = pneg %p500
        $region78: #{tpu_custom_call.1} parent=55 // pred_check_branch
          %503 = sbr.rel (%p501) target = $region80
        $region79: #{tpu_custom_call.1} parent=55 // pred_region
          %v504 = vld [vmem:[%s487] sm:$0xf]
          %v505 = vld [vmem:[%s487 + $0x4] sm:$0xf]
          %v506 = vld [vmem:[%s487 + $0x8] sm:$0xf]
          %v507 = vld [vmem:[%s487 + $0xc] sm:$0xf]
          %v508 = vld [vmem:[%s487 + $0x10] sm:$0xf]
          %v509 = vld [vmem:[%s487 + $0x14] sm:$0xf]
          %v510 = vld [vmem:[%s487 + $0x18] sm:$0xf]
          %v511 = vld [vmem:[%s487 + $0x1c] sm:$0xf]
          %v512 = vld [vmem:[#allocation10] sm:$0xf]
          %v513 = vld [vmem:[#allocation10 + $0x4] sm:$0xf]
          %v514 = vld [vmem:[#allocation10 + $0x8] sm:$0xf]
          %v515 = vld [vmem:[#allocation10 + $0xc] sm:$0xf]
          %v516 = vld [vmem:[#allocation10 + $0x10] sm:$0xf]
          %v517 = vld [vmem:[#allocation10 + $0x14] sm:$0xf]
          %v518 = vld [vmem:[#allocation10 + $0x18] sm:$0xf]
          %v519 = vld [vmem:[#allocation10 + $0x1c] sm:$0xf]
          %v520 = vld [vmem:[#allocation10 + $0x20] sm:$0xf]
          %v521 = vld [vmem:[#allocation10 + $0x24] sm:$0xf]
          %v522 = vld [vmem:[#allocation10 + $0x28] sm:$0xf]
          %v523 = vld [vmem:[#allocation10 + $0x2c] sm:$0xf]
          %v524 = vld [vmem:[#allocation10 + $0x30] sm:$0xf]
          %v525 = vld [vmem:[#allocation10 + $0x34] sm:$0xf]
          %v526 = vld [vmem:[#allocation10 + $0x38] sm:$0xf]
          %v527 = vld [vmem:[#allocation10 + $0x3c] sm:$0xf]
          %v536 = vunpack.c.l.b16 %v504
          %v537 = vunpack.c.l.b16 %v505
          %v538 = vunpack.c.l.b16 %v506
          %v539 = vunpack.c.l.b16 %v507
          %v540 = vunpack.c.l.b16 %v508
          %v541 = vunpack.c.l.b16 %v509
          %v542 = vunpack.c.l.b16 %v510
          %v543 = vunpack.c.l.b16 %v511
          %v544 = vpack.c.b16 %v537, %v536
          %v545 = vpack.c.b16 %v539, %v538
          %v546 = vpack.c.b16 %v541, %v540
          %v547 = vpack.c.b16 %v543, %v542
          %v568 = vunpack.c.l.b16 %v512
          %v569 = vunpack.c.l.b16 %v513
          %v570 = vunpack.c.l.b16 %v514
          %v571 = vunpack.c.l.b16 %v515
          %v572 = vunpack.c.l.b16 %v516
          %v573 = vunpack.c.l.b16 %v517
          %v574 = vunpack.c.l.b16 %v518
          %v575 = vunpack.c.l.b16 %v519
          %v576 = vunpack.c.l.b16 %v520
          %v577 = vunpack.c.l.b16 %v521
          %v578 = vunpack.c.l.b16 %v522
          %v579 = vunpack.c.l.b16 %v523
          %v580 = vunpack.c.l.b16 %v524
          %v581 = vunpack.c.l.b16 %v525
          %v582 = vunpack.c.l.b16 %v526
          %v583 = vunpack.c.l.b16 %v527
          %v584 = vpack.c.b16 %v569, %v568
          %v585 = vpack.c.b16 %v571, %v570
          %v586 = vpack.c.b16 %v573, %v572
          %v587 = vpack.c.b16 %v575, %v574
          %v588 = vpack.c.b16 %v577, %v576
          %v589 = vpack.c.b16 %v579, %v578
          %v590 = vpack.c.b16 %v581, %v580
          %v591 = vpack.c.b16 %v583, %v582
          %600 = vmatprep.subr.bf16.mxu0 0
          %601 = vmatpush1.bf16.msra.mxu0 %v591
          %602 = vmatprep.subr.bf16.mxu0 0
          %603 = vmatpush1.bf16.msra.mxu0 %v590
          %604 = vmatprep.subr.bf16.mxu0 0
          %605 = vmatpush1.bf16.msra.mxu0 %v589
          %606 = vmatprep.subr.bf16.mxu0 0
          %607 = vmatpush1.bf16.msra.mxu0 %v588
          %608 = vmatprep.subr.bf16.mxu0 0
          %609 = vmatpush1.bf16.msra.mxu0 %v587
          %610 = vmatprep.subr.bf16.mxu0 0
          %611 = vmatpush1.bf16.msra.mxu0 %v586
          %612 = vmatprep.subr.bf16.mxu0 0
          %613 = vmatpush1.bf16.msra.mxu0 %v585
          %614 = vmatprep.subr.bf16.mxu0 0
          %615 = vmatpush1.bf16.msra.mxu0 %v584
          %616 = vmatprep.subr.bf16.mxu0 0
          %617 = vmatpush2.bf16.msra.mxu0 0
          %618 = vmatprep.subr.bf16.mxu0 0
          %619 = vmatpush2.bf16.msra.mxu0 0
          %620 = vmatprep.subr.bf16.mxu0 0
          %621 = vmatpush2.bf16.msra.mxu0 0
          %622 = vmatprep.subr.bf16.mxu0 0
          %623 = vmatpush2.bf16.msra.mxu0 0
          %624 = vmatprep.subr.bf16.mxu0 0
          %625 = vmatpush2.bf16.msra.mxu0 0
          %626 = vmatprep.subr.bf16.mxu0 0
          %627 = vmatpush2.bf16.msra.mxu0 0
          %628 = vmatprep.subr.bf16.mxu0 0
          %629 = vmatpush2.bf16.msra.mxu0 0
          %630 = vmatprep.subr.bf16.mxu0 0
          %631 = vmatpush2.bf16.msra.mxu0 0
          %632 = vmatprep.mubr.bf16.mxu0 0
          %633 = vmatmul.mubr.bf16.gmra.mxu0 %v544
          %v634 = vpop.f32.mrf.mxu0
          %v635 = vadd.f32 0.0, %v634
          %v636 = vpop.f32.mrf.mxu0
          %v637 = vpop.f32.mrf.mxu0
          %v638 = vadd.f32 0.0, %v637
          %v639 = vpop.f32.mrf.mxu0
          %640 = vmatprep.mubr.bf16.mxu0 0
          %641 = vmatmul.mubr.bf16.gmra.mxu0 %v545
          %v642 = vpop.f32.mrf.mxu0
          %v643 = vadd.f32 0.0, %v642
          %v644 = vpop.f32.mrf.mxu0
          %v645 = vpop.f32.mrf.mxu0
          %v646 = vadd.f32 0.0, %v645
          %v647 = vpop.f32.mrf.mxu0
          %648 = vmatprep.mubr.bf16.mxu0 0
          %649 = vmatmul.mubr.bf16.gmra.mxu0 %v546
          %v650 = vpop.f32.mrf.mxu0
          %v651 = vadd.f32 0.0, %v650
          %v652 = vpop.f32.mrf.mxu0
          %v653 = vpop.f32.mrf.mxu0
          %v654 = vadd.f32 0.0, %v653
          %v655 = vpop.f32.mrf.mxu0
          %656 = vmatprep.mubr.bf16.mxu0 0
          %657 = vmatmul.mubr.bf16.gmra.mxu0 %v547
          %v658 = vpop.f32.mrf.mxu0
          %v659 = vadd.f32 0.0, %v658
          %v660 = vpop.f32.mrf.mxu0
          %v661 = vpop.f32.mrf.mxu0
          %v662 = vadd.f32 0.0, %v661
          %v663 = vpop.f32.mrf.mxu0
          %664 = vdwg.mxu0
          %v665 = vpack.c.bf16 %v638, %v635
          %v666 = vpack.c.bf16 %v646, %v643
          %v667 = vpack.c.bf16 %v654, %v651
          %v668 = vpack.c.bf16 %v662, %v659
          %v673 = vunpack.c.l.b16 %v665
          %v674 = vunpack.c.h.b16 %v665
          %v675 = vunpack.c.l.b16 %v666
          %v676 = vunpack.c.h.b16 %v666
          %v677 = vunpack.c.l.b16 %v667
          %v678 = vunpack.c.h.b16 %v667
          %v679 = vunpack.c.l.b16 %v668
          %v680 = vunpack.c.h.b16 %v668
          %v681 = vpack.c.b16 %v673, %v673
          %v682 = vpack.c.b16 %v674, %v674
          %v683 = vpack.c.b16 %v675, %v675
          %v684 = vpack.c.b16 %v676, %v676
          %v685 = vpack.c.b16 %v677, %v677
          %v686 = vpack.c.b16 %v678, %v678
          %v687 = vpack.c.b16 %v679, %v679
          %v688 = vpack.c.b16 %v680, %v680
          %697 = vst [vmem:[#allocation3] sm:$0xf] %v681
          %698 = vst [vmem:[#allocation3 + $0x4] sm:$0xf] %v682
          %699 = vst [vmem:[#allocation3 + $0x8] sm:$0xf] %v683
          %700 = vst [vmem:[#allocation3 + $0xc] sm:$0xf] %v684
          %701 = vst [vmem:[#allocation3 + $0x10] sm:$0xf] %v685
          %702 = vst [vmem:[#allocation3 + $0x14] sm:$0xf] %v686
          %703 = vst [vmem:[#allocation3 + $0x18] sm:$0xf] %v687
          %704 = vst [vmem:[#allocation3 + $0x1c] sm:$0xf] %v688
          %v705 = vld [vmem:[#allocation5] sm:$0xf]
          %v706 = vld [vmem:[#allocation5 + $0x4] sm:$0xf]
          %v707 = vld [vmem:[#allocation5 + $0x8] sm:$0xf]
          %v708 = vld [vmem:[#allocation5 + $0xc] sm:$0xf]
          %v709 = vld [vmem:[#allocation5 + $0x10] sm:$0xf]
          %v710 = vld [vmem:[#allocation5 + $0x14] sm:$0xf]
          %v711 = vld [vmem:[#allocation5 + $0x18] sm:$0xf]
          %v712 = vld [vmem:[#allocation5 + $0x1c] sm:$0xf]
          %v713 = vld [vmem:[#allocation11] sm:$0xf]
          %v714 = vld [vmem:[#allocation11 + $0x4] sm:$0xf]
          %v715 = vld [vmem:[#allocation11 + $0x8] sm:$0xf]
          %v716 = vld [vmem:[#allocation11 + $0xc] sm:$0xf]
          %v717 = vld [vmem:[#allocation11 + $0x10] sm:$0xf]
          %v718 = vld [vmem:[#allocation11 + $0x14] sm:$0xf]
          %v719 = vld [vmem:[#allocation11 + $0x18] sm:$0xf]
          %v720 = vld [vmem:[#allocation11 + $0x1c] sm:$0xf]
          %v721 = vld [vmem:[#allocation11 + $0x20] sm:$0xf]
          %v722 = vld [vmem:[#allocation11 + $0x24] sm:$0xf]
          %v723 = vld [vmem:[#allocation11 + $0x28] sm:$0xf]
          %v724 = vld [vmem:[#allocation11 + $0x2c] sm:$0xf]
          %v725 = vld [vmem:[#allocation11 + $0x30] sm:$0xf]
          %v726 = vld [vmem:[#allocation11 + $0x34] sm:$0xf]
          %v727 = vld [vmem:[#allocation11 + $0x38] sm:$0xf]
          %v728 = vld [vmem:[#allocation11 + $0x3c] sm:$0xf]
          %v737 = vunpack.c.l.b16 %v705
          %v738 = vunpack.c.l.b16 %v706
          %v739 = vunpack.c.l.b16 %v707
          %v740 = vunpack.c.l.b16 %v708
          %v741 = vunpack.c.l.b16 %v709
          %v742 = vunpack.c.l.b16 %v710
          %v743 = vunpack.c.l.b16 %v711
          %v744 = vunpack.c.l.b16 %v712
          %v745 = vpack.c.b16 %v738, %v737
          %v746 = vpack.c.b16 %v740, %v739
          %v747 = vpack.c.b16 %v742, %v741
          %v748 = vpack.c.b16 %v744, %v743
          %v769 = vunpack.c.l.b16 %v713
          %v770 = vunpack.c.l.b16 %v714
          %v771 = vunpack.c.l.b16 %v715
          %v772 = vunpack.c.l.b16 %v716
          %v773 = vunpack.c.l.b16 %v717
          %v774 = vunpack.c.l.b16 %v718
          %v775 = vunpack.c.l.b16 %v719
          %v776 = vunpack.c.l.b16 %v720
          %v777 = vunpack.c.l.b16 %v721
          %v778 = vunpack.c.l.b16 %v722
          %v779 = vunpack.c.l.b16 %v723
          %v780 = vunpack.c.l.b16 %v724
          %v781 = vunpack.c.l.b16 %v725
          %v782 = vunpack.c.l.b16 %v726
          %v783 = vunpack.c.l.b16 %v727
          %v784 = vunpack.c.l.b16 %v728
          %v785 = vpack.c.b16 %v770, %v769
          %v786 = vpack.c.b16 %v772, %v771
          %v787 = vpack.c.b16 %v774, %v773
          %v788 = vpack.c.b16 %v776, %v775
          %v789 = vpack.c.b16 %v778, %v777
          %v790 = vpack.c.b16 %v780, %v779
          %v791 = vpack.c.b16 %v782, %v781
          %v792 = vpack.c.b16 %v784, %v783
          %801 = vmatprep.subr.bf16.mxu0 0
          %802 = vmatpush1.bf16.msra.mxu0 %v792
          %803 = vmatprep.subr.bf16.mxu0 0
          %804 = vmatpush1.bf16.msra.mxu0 %v791
          %805 = vmatprep.subr.bf16.mxu0 0
          %806 = vmatpush1.bf16.msra.mxu0 %v790
          %807 = vmatprep.subr.bf16.mxu0 0
          %808 = vmatpush1.bf16.msra.mxu0 %v789
          %809 = vmatprep.subr.bf16.mxu0 0
          %810 = vmatpush1.bf16.msra.mxu0 %v788
          %811 = vmatprep.subr.bf16.mxu0 0
          %812 = vmatpush1.bf16.msra.mxu0 %v787
          %813 = vmatprep.subr.bf16.mxu0 0
          %814 = vmatpush1.bf16.msra.mxu0 %v786
          %815 = vmatprep.subr.bf16.mxu0 0
          %816 = vmatpush1.bf16.msra.mxu0 %v785
          %817 = vmatprep.subr.bf16.mxu0 0
          %818 = vmatpush2.bf16.msra.mxu0 0
          %819 = vmatprep.subr.bf16.mxu0 0
          %820 = vmatpush2.bf16.msra.mxu0 0
          %821 = vmatprep.subr.bf16.mxu0 0
          %822 = vmatpush2.bf16.msra.mxu0 0
          %823 = vmatprep.subr.bf16.mxu0 0
          %824 = vmatpush2.bf16.msra.mxu0 0
          %825 = vmatprep.subr.bf16.mxu0 0
          %826 = vmatpush2.bf16.msra.mxu0 0
          %827 = vmatprep.subr.bf16.mxu0 0
          %828 = vmatpush2.bf16.msra.mxu0 0
          %829 = vmatprep.subr.bf16.mxu0 0
          %830 = vmatpush2.bf16.msra.mxu0 0
          %831 = vmatprep.subr.bf16.mxu0 0
          %832 = vmatpush2.bf16.msra.mxu0 0
          %833 = vmatprep.mubr.bf16.mxu0 0
          %834 = vmatmul.mubr.bf16.gmra.mxu0 %v745
          %v835 = vpop.f32.mrf.mxu0
          %v836 = vadd.f32 0.0, %v835
          %v837 = vpop.f32.mrf.mxu0
          %v838 = vpop.f32.mrf.mxu0
          %v839 = vadd.f32 0.0, %v838
          %v840 = vpop.f32.mrf.mxu0
          %841 = vmatprep.mubr.bf16.mxu0 0
          %842 = vmatmul.mubr.bf16.gmra.mxu0 %v746
          %v843 = vpop.f32.mrf.mxu0
          %v844 = vadd.f32 0.0, %v843
          %v845 = vpop.f32.mrf.mxu0
          %v846 = vpop.f32.mrf.mxu0
          %v847 = vadd.f32 0.0, %v846
          %v848 = vpop.f32.mrf.mxu0
          %849 = vmatprep.mubr.bf16.mxu0 0
          %850 = vmatmul.mubr.bf16.gmra.mxu0 %v747
          %v851 = vpop.f32.mrf.mxu0
          %v852 = vadd.f32 0.0, %v851
          %v853 = vpop.f32.mrf.mxu0
          %v854 = vpop.f32.mrf.mxu0
          %v855 = vadd.f32 0.0, %v854
          %v856 = vpop.f32.mrf.mxu0
          %857 = vmatprep.mubr.bf16.mxu0 0
          %858 = vmatmul.mubr.bf16.gmra.mxu0 %v748
          %v859 = vpop.f32.mrf.mxu0
          %v860 = vadd.f32 0.0, %v859
          %v861 = vpop.f32.mrf.mxu0
          %v862 = vpop.f32.mrf.mxu0
          %v863 = vadd.f32 0.0, %v862
          %v864 = vpop.f32.mrf.mxu0
          %865 = vdwg.mxu0
          %v866 = vpack.c.bf16 %v839, %v836
          %v867 = vpack.c.bf16 %v847, %v844
          %v868 = vpack.c.bf16 %v855, %v852
          %v869 = vpack.c.bf16 %v863, %v860
          %v874 = vunpack.c.l.b16 %v866
          %v875 = vunpack.c.h.b16 %v866
          %v876 = vunpack.c.l.b16 %v867
          %v877 = vunpack.c.h.b16 %v867
          %v878 = vunpack.c.l.b16 %v868
          %v879 = vunpack.c.h.b16 %v868
          %v880 = vunpack.c.l.b16 %v869
          %v881 = vunpack.c.h.b16 %v869
          %v882 = vpack.c.b16 %v874, %v874
          %v883 = vpack.c.b16 %v875, %v875
          %v884 = vpack.c.b16 %v876, %v876
          %v885 = vpack.c.b16 %v877, %v877
          %v886 = vpack.c.b16 %v878, %v878
          %v887 = vpack.c.b16 %v879, %v879
          %v888 = vpack.c.b16 %v880, %v880
          %v889 = vpack.c.b16 %v881, %v881
          %898 = vst [vmem:[#allocation4] sm:$0xf] %v882
          %899 = vst [vmem:[#allocation4 + $0x4] sm:$0xf] %v883
          %900 = vst [vmem:[#allocation4 + $0x8] sm:$0xf] %v884
          %901 = vst [vmem:[#allocation4 + $0xc] sm:$0xf] %v885
          %902 = vst [vmem:[#allocation4 + $0x10] sm:$0xf] %v886
          %903 = vst [vmem:[#allocation4 + $0x14] sm:$0xf] %v887
          %904 = vst [vmem:[#allocation4 + $0x18] sm:$0xf] %v888
          %905 = vst [vmem:[#allocation4 + $0x1c] sm:$0xf] %v889
        $region80: #{tpu_custom_call.1} parent=55 // pred_fallthru
          _
        %v906 = vld [vmem:[%s481] sm:$0xf]
        %v907 = vld [vmem:[%s481 + $0x4] sm:$0xf]
        %v908 = vld [vmem:[%s481 + $0x8] sm:$0xf]
        %v909 = vld [vmem:[%s481 + $0xc] sm:$0xf]
        %v910 = vld [vmem:[%s481 + $0x10] sm:$0xf]
        %v911 = vld [vmem:[%s481 + $0x14] sm:$0xf]
        %v912 = vld [vmem:[%s481 + $0x18] sm:$0xf]
        %v913 = vld [vmem:[%s481 + $0x1c] sm:$0xf]
        %v914 = vld [vmem:[#allocation8] sm:$0xf]
        %v915 = vld [vmem:[#allocation8 + $0x4] sm:$0xf]
        %v916 = vld [vmem:[#allocation8 + $0x8] sm:$0xf]
        %v917 = vld [vmem:[#allocation8 + $0xc] sm:$0xf]
        %v918 = vld [vmem:[#allocation8 + $0x10] sm:$0xf]
        %v919 = vld [vmem:[#allocation8 + $0x14] sm:$0xf]
        %v920 = vld [vmem:[#allocation8 + $0x18] sm:$0xf]
        %v921 = vld [vmem:[#allocation8 + $0x1c] sm:$0xf]
        %v922 = vld [vmem:[#allocation8 + $0x20] sm:$0xf]
        %v923 = vld [vmem:[#allocation8 + $0x24] sm:$0xf]
        %v924 = vld [vmem:[#allocation8 + $0x28] sm:$0xf]
        %v925 = vld [vmem:[#allocation8 + $0x2c] sm:$0xf]
        %v926 = vld [vmem:[#allocation8 + $0x30] sm:$0xf]
        %v927 = vld [vmem:[#allocation8 + $0x34] sm:$0xf]
        %v928 = vld [vmem:[#allocation8 + $0x38] sm:$0xf]
        %v929 = vld [vmem:[#allocation8 + $0x3c] sm:$0xf]
        %v938 = vunpack.c.l.b16 %v906
        %v939 = vunpack.c.l.b16 %v907
        %v940 = vunpack.c.l.b16 %v908
        %v941 = vunpack.c.l.b16 %v909
        %v942 = vunpack.c.l.b16 %v910
        %v943 = vunpack.c.l.b16 %v911
        %v944 = vunpack.c.l.b16 %v912
        %v945 = vunpack.c.l.b16 %v913
        %v946 = vpack.c.b16 %v939, %v938
        %v947 = vpack.c.b16 %v941, %v940
        %v948 = vpack.c.b16 %v943, %v942
        %v949 = vpack.c.b16 %v945, %v944
        %v970 = vunpack.c.l.b16 %v914
        %v971 = vunpack.c.l.b16 %v915
        %v972 = vunpack.c.l.b16 %v916
        %v973 = vunpack.c.l.b16 %v917
        %v974 = vunpack.c.l.b16 %v918
        %v975 = vunpack.c.l.b16 %v919
        %v976 = vunpack.c.l.b16 %v920
        %v977 = vunpack.c.l.b16 %v921
        %v978 = vunpack.c.l.b16 %v922
        %v979 = vunpack.c.l.b16 %v923
        %v980 = vunpack.c.l.b16 %v924
        %v981 = vunpack.c.l.b16 %v925
        %v982 = vunpack.c.l.b16 %v926
        %v983 = vunpack.c.l.b16 %v927
        %v984 = vunpack.c.l.b16 %v928
        %v985 = vunpack.c.l.b16 %v929
        %v986 = vpack.c.b16 %v971, %v970
        %v987 = vpack.c.b16 %v973, %v972
        %v988 = vpack.c.b16 %v975, %v974
        %v989 = vpack.c.b16 %v977, %v976
        %v990 = vpack.c.b16 %v979, %v978
        %v991 = vpack.c.b16 %v981, %v980
        %v992 = vpack.c.b16 %v983, %v982
        %v993 = vpack.c.b16 %v985, %v984
        %1002 = vmatprep.subr.bf16.mxu0 0
        %1003 = vmatpush1.bf16.msra.mxu0 %v993
        %1004 = vmatprep.subr.bf16.mxu0 0
        %1005 = vmatpush1.bf16.msra.mxu0 %v992
        %1006 = vmatprep.subr.bf16.mxu0 0
        %1007 = vmatpush1.bf16.msra.mxu0 %v991
        %1008 = vmatprep.subr.bf16.mxu0 0
        %1009 = vmatpush1.bf16.msra.mxu0 %v990
        %1010 = vmatprep.subr.bf16.mxu0 0
        %1011 = vmatpush1.bf16.msra.mxu0 %v989
        %1012 = vmatprep.subr.bf16.mxu0 0
        %1013 = vmatpush1.bf16.msra.mxu0 %v988
        %1014 = vmatprep.subr.bf16.mxu0 0
        %1015 = vmatpush1.bf16.msra.mxu0 %v987
        %1016 = vmatprep.subr.bf16.mxu0 0
        %1017 = vmatpush1.bf16.msra.mxu0 %v986
        %1018 = vmatprep.subr.bf16.mxu0 0
        %1019 = vmatpush2.bf16.msra.mxu0 0
        %1020 = vmatprep.subr.bf16.mxu0 0
        %1021 = vmatpush2.bf16.msra.mxu0 0
        %1022 = vmatprep.subr.bf16.mxu0 0
        %1023 = vmatpush2.bf16.msra.mxu0 0
        %1024 = vmatprep.subr.bf16.mxu0 0
        %1025 = vmatpush2.bf16.msra.mxu0 0
        %1026 = vmatprep.subr.bf16.mxu0 0
        %1027 = vmatpush2.bf16.msra.mxu0 0
        %1028 = vmatprep.subr.bf16.mxu0 0
        %1029 = vmatpush2.bf16.msra.mxu0 0
        %1030 = vmatprep.subr.bf16.mxu0 0
        %1031 = vmatpush2.bf16.msra.mxu0 0
        %1032 = vmatprep.subr.bf16.mxu0 0
        %1033 = vmatpush2.bf16.msra.mxu0 0
        %1034 = vmatprep.mubr.bf16.mxu0 0
        %1035 = vmatmul.mubr.bf16.gmra.mxu0 %v946
        %v1036 = vpop.f32.mrf.mxu0
        %v1037 = vadd.f32 0.0, %v1036
        %v1038 = vpop.f32.mrf.mxu0
        %v1039 = vpop.f32.mrf.mxu0
        %v1040 = vadd.f32 0.0, %v1039
        %v1041 = vpop.f32.mrf.mxu0
        %1042 = vmatprep.mubr.bf16.mxu0 0
        %1043 = vmatmul.mubr.bf16.gmra.mxu0 %v947
        %v1044 = vpop.f32.mrf.mxu0
        %v1045 = vadd.f32 0.0, %v1044
        %v1046 = vpop.f32.mrf.mxu0
        %v1047 = vpop.f32.mrf.mxu0
        %v1048 = vadd.f32 0.0, %v1047
        %v1049 = vpop.f32.mrf.mxu0
        %1050 = vmatprep.mubr.bf16.mxu0 0
        %1051 = vmatmul.mubr.bf16.gmra.mxu0 %v948
        %v1052 = vpop.f32.mrf.mxu0
        %v1053 = vadd.f32 0.0, %v1052
        %v1054 = vpop.f32.mrf.mxu0
        %v1055 = vpop.f32.mrf.mxu0
        %v1056 = vadd.f32 0.0, %v1055
        %v1057 = vpop.f32.mrf.mxu0
        %1058 = vmatprep.mubr.bf16.mxu0 0
        %1059 = vmatmul.mubr.bf16.gmra.mxu0 %v949
        %v1060 = vpop.f32.mrf.mxu0
        %v1061 = vadd.f32 0.0, %v1060
        %v1062 = vpop.f32.mrf.mxu0
        %v1063 = vpop.f32.mrf.mxu0
        %v1064 = vadd.f32 0.0, %v1063
        %v1065 = vpop.f32.mrf.mxu0
        %1066 = vdwg.mxu0
        %v1067 = vmul.f32 %v1037, 0.17677669
        %v1068 = vmul.f32 %v1040, 0.17677669
        %v1069 = vmul.f32 %v1045, 0.17677669
        %v1070 = vmul.f32 %v1048, 0.17677669
        %v1071 = vmul.f32 %v1053, 0.17677669
        %v1072 = vmul.f32 %v1056, 0.17677669
        %v1073 = vmul.f32 %v1061, 0.17677669
        %v1074 = vmul.f32 %v1064, 0.17677669
        %v1075 = vpack.c.bf16 %v1068, %v1067
        %v1076 = vpack.c.bf16 %v1070, %v1069
        %v1077 = vpack.c.bf16 %v1072, %v1071
        %v1078 = vpack.c.bf16 %v1074, %v1073
        %v1079 = vld [vmem:[%s496] sm:$0xf]
        %v1080 = vld [vmem:[%s496 + $0x4] sm:$0xf]
        %v1081 = vld [vmem:[%s496 + $0x8] sm:$0xf]
        %v1082 = vld [vmem:[%s496 + $0xc] sm:$0xf]
        %v1083 = vld [vmem:[%s496 + $0x10] sm:$0xf]
        %v1084 = vld [vmem:[%s496 + $0x14] sm:$0xf]
        %v1085 = vld [vmem:[%s496 + $0x18] sm:$0xf]
        %v1086 = vld [vmem:[%s496 + $0x1c] sm:$0xf]
        %v1087 = vunpack.c.l.bf16 %v1079
        %v1088 = vunpack.c.l.bf16 %v1080
        %v1089 = vunpack.c.l.bf16 %v1081
        %v1090 = vunpack.c.l.bf16 %v1082
        %v1091 = vunpack.c.l.bf16 %v1083
        %v1092 = vunpack.c.l.bf16 %v1084
        %v1093 = vunpack.c.l.bf16 %v1085
        %v1094 = vunpack.c.l.bf16 %v1086
        %v1095 = vld [vmem:[#allocation3] sm:$0xf]
        %v1096 = vld [vmem:[#allocation3 + $0x4] sm:$0xf]
        %v1097 = vld [vmem:[#allocation3 + $0x8] sm:$0xf]
        %v1098 = vld [vmem:[#allocation3 + $0xc] sm:$0xf]
        %v1099 = vld [vmem:[#allocation3 + $0x10] sm:$0xf]
        %v1100 = vld [vmem:[#allocation3 + $0x14] sm:$0xf]
        %v1101 = vld [vmem:[#allocation3 + $0x18] sm:$0xf]
        %v1102 = vld [vmem:[#allocation3 + $0x1c] sm:$0xf]
        %v1111 = vunpack.c.l.b16 %v1095
        %v1112 = vunpack.c.l.b16 %v1096
        %v1113 = vunpack.c.l.b16 %v1097
        %v1114 = vunpack.c.l.b16 %v1098
        %v1115 = vunpack.c.l.b16 %v1099
        %v1116 = vunpack.c.l.b16 %v1100
        %v1117 = vunpack.c.l.b16 %v1101
        %v1118 = vunpack.c.l.b16 %v1102
        %v1119 = vpack.c.b16 %v1112, %v1111
        %v1120 = vpack.c.b16 %v1114, %v1113
        %v1121 = vpack.c.b16 %v1116, %v1115
        %v1122 = vpack.c.b16 %v1118, %v1117
        %vm1123 = vcmask 261120
        %v1125 = vsel %vm1123, %v1075, 0
        %v1128 = vsel %vm1123, %v1076, 0
        %v1131 = vsel %vm1123, %v1077, 0
        %v1134 = vsel %vm1123, %v1078, 0
        %v1137 = vsel %vm1123, %v1119, 0
        %v1140 = vsel %vm1123, %v1120, 0
        %v1143 = vsel %vm1123, %v1121, 0
        %v1146 = vsel %vm1123, %v1122, 0
        %1148 = vmatprep.subr.bf16.mxu0 0
        %1149 = vmatpush1.bf16.xpose.msra.mxu0 0
        %1150 = vmatprep.subr.bf16.mxu0 0
        %1151 = vmatpush1.bf16.xpose.msra.mxu0 0
        %1152 = vmatprep.subr.bf16.mxu0 0
        %1153 = vmatpush1.bf16.xpose.msra.mxu0 0
        %1154 = vmatprep.subr.bf16.mxu0 0
        %1155 = vmatpush1.bf16.xpose.msra.mxu0 0
        %1156 = vmatprep.subr.bf16.mxu0 0
        %1157 = vmatpush1.bf16.xpose.msra.mxu0 %v1146
        %1158 = vmatprep.subr.bf16.mxu0 0
        %1159 = vmatpush1.bf16.xpose.msra.mxu0 %v1143
        %1160 = vmatprep.subr.bf16.mxu0 0
        %1161 = vmatpush1.bf16.xpose.msra.mxu0 %v1140
        %1162 = vmatprep.subr.bf16.mxu0 0
        %1163 = vmatpush1.bf16.xpose.msra.mxu0 %v1137
        %1164 = vmatprep.subr.bf16.mxu0 0
        %1165 = vmatpush2.bf16.xpose.msra.mxu0 0
        %1166 = vmatprep.subr.bf16.mxu0 0
        %1167 = vmatpush2.bf16.xpose.msra.mxu0 0
        %1168 = vmatprep.subr.bf16.mxu0 0
        %1169 = vmatpush2.bf16.xpose.msra.mxu0 0
        %1170 = vmatprep.subr.bf16.mxu0 0
        %1171 = vmatpush2.bf16.xpose.msra.mxu0 0
        %1172 = vmatprep.subr.bf16.mxu0 0
        %1173 = vmatpush2.bf16.xpose.msra.mxu0 0
        %1174 = vmatprep.subr.bf16.mxu0 0
        %1175 = vmatpush2.bf16.xpose.msra.mxu0 0
        %1176 = vmatprep.subr.bf16.mxu0 0
        %1177 = vmatpush2.bf16.xpose.msra.mxu0 0
        %1178 = vmatprep.subr.bf16.mxu0 0
        %1179 = vmatpush2.bf16.xpose.msra.mxu0 0
        %1180 = vmatprep.mubr.bf16.mxu0 0
        %1181 = vmatmul.mubr.bf16.gmra.mxu0 %v1125
        %v1182 = vpop.f32.mrf.mxu0
        %v1183 = vadd.f32 %v1087, %v1182
        %v1184 = vpop.f32.mrf.mxu0
        %v1185 = vpop.f32.mrf.mxu0
        %v1186 = vadd.f32 %v1088, %v1185
        %v1187 = vpop.f32.mrf.mxu0
        %1188 = vmatprep.mubr.bf16.mxu0 0
        %1189 = vmatmul.mubr.bf16.gmra.mxu0 %v1128
        %v1190 = vpop.f32.mrf.mxu0
        %v1191 = vadd.f32 %v1089, %v1190
        %v1192 = vpop.f32.mrf.mxu0
        %v1193 = vpop.f32.mrf.mxu0
        %v1194 = vadd.f32 %v1090, %v1193
        %v1195 = vpop.f32.mrf.mxu0
        %1196 = vmatprep.mubr.bf16.mxu0 0
        %1197 = vmatmul.mubr.bf16.gmra.mxu0 %v1131
        %v1198 = vpop.f32.mrf.mxu0
        %v1199 = vadd.f32 %v1091, %v1198
        %v1200 = vpop.f32.mrf.mxu0
        %v1201 = vpop.f32.mrf.mxu0
        %v1202 = vadd.f32 %v1092, %v1201
        %v1203 = vpop.f32.mrf.mxu0
        %1204 = vmatprep.mubr.bf16.mxu0 0
        %1205 = vmatmul.mubr.bf16.gmra.mxu0 %v1134
        %v1206 = vpop.f32.mrf.mxu0
        %v1207 = vadd.f32 %v1093, %v1206
        %v1208 = vpop.f32.mrf.mxu0
        %v1209 = vpop.f32.mrf.mxu0
        %v1210 = vadd.f32 %v1094, %v1209
        %v1211 = vpop.f32.mrf.mxu0
        %1212 = vdwg.mxu0
        %vm1213 = vcmask 523264
        %v1214 = vsel %vm1213, %v1183, -inf
        %1215 = vmax.xlane.f32.xlu0 %v1214
        %v1216 = vpop.xlane.xlu0 %1215
        %v1217 = vsel %vm1213, %v1186, -inf
        %1218 = vmax.xlane.f32.xlu0 %v1217
        %v1219 = vpop.xlane.xlu0 %1218
        %v1220 = vsel %vm1213, %v1191, -inf
        %1221 = vmax.xlane.f32.xlu0 %v1220
        %v1222 = vpop.xlane.xlu0 %1221
        %v1223 = vsel %vm1213, %v1194, -inf
        %1224 = vmax.xlane.f32.xlu0 %v1223
        %v1225 = vpop.xlane.xlu0 %1224
        %v1226 = vsel %vm1213, %v1199, -inf
        %1227 = vmax.xlane.f32.xlu0 %v1226
        %v1228 = vpop.xlane.xlu0 %1227
        %v1229 = vsel %vm1213, %v1202, -inf
        %1230 = vmax.xlane.f32.xlu0 %v1229
        %v1231 = vpop.xlane.xlu0 %1230
        %v1232 = vsel %vm1213, %v1207, -inf
        %1233 = vmax.xlane.f32.xlu0 %v1232
        %v1234 = vpop.xlane.xlu0 %1233
        %v1235 = vsel %vm1213, %v1210, -inf
        %1236 = vmax.xlane.f32.xlu0 %v1235
        %v1237 = vpop.xlane.xlu0 %1236
        %v1238 = vsub.f32 %v1183, %v1216
        %v1239 = vsub.f32 %v1186, %v1219
        %v1240 = vsub.f32 %v1191, %v1222
        %v1241 = vsub.f32 %v1194, %v1225
        %v1242 = vsub.f32 %v1199, %v1228
        %v1243 = vsub.f32 %v1202, %v1231
        %v1244 = vsub.f32 %v1207, %v1234
        %v1245 = vsub.f32 %v1210, %v1237
        %v1246 = vmul.f32 %v1238, 1.442695
        %v1247 = vpow.pop %v1246
        %v1248 = vmul.f32 %v1239, 1.442695
        %v1249 = vpow.pop %v1248
        %v1250 = vmul.f32 %v1240, 1.442695
        %v1251 = vpow.pop %v1250
        %v1252 = vmul.f32 %v1241, 1.442695
        %v1253 = vpow.pop %v1252
        %v1254 = vmul.f32 %v1242, 1.442695
        %v1255 = vpow.pop %v1254
        %v1256 = vmul.f32 %v1243, 1.442695
        %v1257 = vpow.pop %v1256
        %v1258 = vmul.f32 %v1244, 1.442695
        %v1259 = vpow.pop %v1258
        %v1260 = vmul.f32 %v1245, 1.442695
        %v1261 = vpow.pop %v1260
        %v1262 = vsel %vm1213, %v1247, 0.0
        %1263 = vadd.xlane.f32.xlu0 %v1262
        %v1264 = vpop.xlane.xlu0 %1263
        %v1265 = vsel %vm1213, %v1249, 0.0
        %1266 = vadd.xlane.f32.xlu0 %v1265
        %v1267 = vpop.xlane.xlu0 %1266
        %v1268 = vsel %vm1213, %v1251, 0.0
        %1269 = vadd.xlane.f32.xlu0 %v1268
        %v1270 = vpop.xlane.xlu0 %1269
        %v1271 = vsel %vm1213, %v1253, 0.0
        %1272 = vadd.xlane.f32.xlu0 %v1271
        %v1273 = vpop.xlane.xlu0 %1272
        %v1274 = vsel %vm1213, %v1255, 0.0
        %1275 = vadd.xlane.f32.xlu0 %v1274
        %v1276 = vpop.xlane.xlu0 %1275
        %v1277 = vsel %vm1213, %v1257, 0.0
        %1278 = vadd.xlane.f32.xlu0 %v1277
        %v1279 = vpop.xlane.xlu0 %1278
        %v1280 = vsel %vm1213, %v1259, 0.0
        %1281 = vadd.xlane.f32.xlu0 %v1280
        %v1282 = vpop.xlane.xlu0 %1281
        %v1283 = vsel %vm1213, %v1261, 0.0
        %1284 = vadd.xlane.f32.xlu0 %v1283
        %v1285 = vpop.xlane.xlu0 %1284
        %v1286 = vrcp.pop %v1264
        %v1287 = vrcp.pop %v1267
        %v1288 = vrcp.pop %v1270
        %v1289 = vrcp.pop %v1273
        %v1290 = vrcp.pop %v1276
        %v1291 = vrcp.pop %v1279
        %v1292 = vrcp.pop %v1282
        %v1293 = vrcp.pop %v1285
        %v1294 = vpack.c.bf16 %v1249, %v1247
        %v1295 = vpack.c.bf16 %v1253, %v1251
        %v1296 = vpack.c.bf16 %v1257, %v1255
        %v1297 = vpack.c.bf16 %v1261, %v1259
        %v1298 = vld [vmem:[#allocation4] sm:$0xf]
        %v1299 = vld [vmem:[#allocation4 + $0x4] sm:$0xf]
        %v1300 = vld [vmem:[#allocation4 + $0x8] sm:$0xf]
        %v1301 = vld [vmem:[#allocation4 + $0xc] sm:$0xf]
        %v1302 = vld [vmem:[#allocation4 + $0x10] sm:$0xf]
        %v1303 = vld [vmem:[#allocation4 + $0x14] sm:$0xf]
        %v1304 = vld [vmem:[#allocation4 + $0x18] sm:$0xf]
        %v1305 = vld [vmem:[#allocation4 + $0x1c] sm:$0xf]
        %v1314 = vunpack.c.l.b16 %v1298
        %v1315 = vunpack.c.l.b16 %v1299
        %v1316 = vunpack.c.l.b16 %v1300
        %v1317 = vunpack.c.l.b16 %v1301
        %v1318 = vunpack.c.l.b16 %v1302
        %v1319 = vunpack.c.l.b16 %v1303
        %v1320 = vunpack.c.l.b16 %v1304
        %v1321 = vunpack.c.l.b16 %v1305
        %v1322 = vpack.c.b16 %v1315, %v1314
        %v1323 = vpack.c.b16 %v1317, %v1316
        %v1324 = vpack.c.b16 %v1319, %v1318
        %v1325 = vpack.c.b16 %v1321, %v1320
        %v1331 = vsel %vm1213, %v1294, 0
        %v1334 = vsel %vm1213, %v1295, 0
        %v1337 = vsel %vm1213, %v1296, 0
        %v1340 = vsel %vm1213, %v1297, 0
        %1342 = vmatprep.subr.bf16.mxu0 0
        %1343 = vmatpush1.bf16.msra.mxu0 0
        %1344 = vmatprep.subr.bf16.mxu0 0
        %1345 = vmatpush1.bf16.msra.mxu0 0
        %1346 = vmatprep.subr.bf16.mxu0 0
        %1347 = vmatpush1.bf16.msra.mxu0 0
        %1348 = vmatprep.subr.bf16.mxu0 0
        %1349 = vmatpush1.bf16.msra.mxu0 0
        %1350 = vmatprep.subr.bf16.mxu0 0
        %1351 = vmatpush1.bf16.msra.mxu0 %v1325
        %1352 = vmatprep.subr.bf16.mxu0 0
        %1353 = vmatpush1.bf16.msra.mxu0 %v1324
        %1354 = vmatprep.subr.bf16.mxu0 0
        %1355 = vmatpush1.bf16.msra.mxu0 %v1323
        %1356 = vmatprep.subr.bf16.mxu0 0
        %1357 = vmatpush1.bf16.msra.mxu0 %v1322
        %1358 = vmatprep.subr.bf16.mxu0 0
        %1359 = vmatpush2.bf16.msra.mxu0 0
        %1360 = vmatprep.subr.bf16.mxu0 0
        %1361 = vmatpush2.bf16.msra.mxu0 0
        %1362 = vmatprep.subr.bf16.mxu0 0
        %1363 = vmatpush2.bf16.msra.mxu0 0
        %1364 = vmatprep.subr.bf16.mxu0 0
        %1365 = vmatpush2.bf16.msra.mxu0 0
        %1366 = vmatprep.subr.bf16.mxu0 0
        %1367 = vmatpush2.bf16.msra.mxu0 0
        %1368 = vmatprep.subr.bf16.mxu0 0
        %1369 = vmatpush2.bf16.msra.mxu0 0
        %1370 = vmatprep.subr.bf16.mxu0 0
        %1371 = vmatpush2.bf16.msra.mxu0 0
        %1372 = vmatprep.subr.bf16.mxu0 0
        %1373 = vmatpush2.bf16.msra.mxu0 0
        %1374 = vmatprep.mubr.bf16.mxu0 0
        %1375 = vmatmul.mubr.bf16.gmra.mxu0 %v1331
        %v1376 = vpop.f32.mrf.mxu0
        %v1377 = vadd.f32 0.0, %v1376
        %v1378 = vpop.f32.mrf.mxu0
        %v1379 = vpop.f32.mrf.mxu0
        %v1380 = vadd.f32 0.0, %v1379
        %v1381 = vpop.f32.mrf.mxu0
        %1382 = vmatprep.mubr.bf16.mxu0 0
        %1383 = vmatmul.mubr.bf16.gmra.mxu0 %v1334
        %v1384 = vpop.f32.mrf.mxu0
        %v1385 = vadd.f32 0.0, %v1384
        %v1386 = vpop.f32.mrf.mxu0
        %v1387 = vpop.f32.mrf.mxu0
        %v1388 = vadd.f32 0.0, %v1387
        %v1389 = vpop.f32.mrf.mxu0
        %1390 = vmatprep.mubr.bf16.mxu0 0
        %1391 = vmatmul.mubr.bf16.gmra.mxu0 %v1337
        %v1392 = vpop.f32.mrf.mxu0
        %v1393 = vadd.f32 0.0, %v1392
        %v1394 = vpop.f32.mrf.mxu0
        %v1395 = vpop.f32.mrf.mxu0
        %v1396 = vadd.f32 0.0, %v1395
        %v1397 = vpop.f32.mrf.mxu0
        %1398 = vmatprep.mubr.bf16.mxu0 0
        %1399 = vmatmul.mubr.bf16.gmra.mxu0 %v1340
        %v1400 = vpop.f32.mrf.mxu0
        %v1401 = vadd.f32 0.0, %v1400
        %v1402 = vpop.f32.mrf.mxu0
        %v1403 = vpop.f32.mrf.mxu0
        %v1404 = vadd.f32 0.0, %v1403
        %v1405 = vpop.f32.mrf.mxu0
        %1406 = vdwg.mxu0
        %v1407 = vmul.f32 %v1377, %v1286
        %v1408 = vmul.f32 %v1380, %v1287
        %v1409 = vmul.f32 %v1385, %v1288
        %v1410 = vmul.f32 %v1388, %v1289
        %v1411 = vmul.f32 %v1393, %v1290
        %v1412 = vmul.f32 %v1396, %v1291
        %v1413 = vmul.f32 %v1401, %v1292
        %v1414 = vmul.f32 %v1404, %v1293
        %1415 = vst.msk [vmem:[#allocation2] sm:$0xff] %vm1123, %v1407
        %1416 = vst.msk [vmem:[#allocation2 + $0x8] sm:$0xff] %vm1123, %v1408
        %1417 = vst.msk [vmem:[#allocation2 + $0x10] sm:$0xff] %vm1123, %v1409
        %1418 = vst.msk [vmem:[#allocation2 + $0x18] sm:$0xff] %vm1123, %v1410
        %1419 = vst.msk [vmem:[#allocation2 + $0x20] sm:$0xff] %vm1123, %v1411
        %1420 = vst.msk [vmem:[#allocation2 + $0x28] sm:$0xff] %vm1123, %v1412
        %1421 = vst.msk [vmem:[#allocation2 + $0x30] sm:$0xff] %vm1123, %v1413
        %1422 = vst.msk [vmem:[#allocation2 + $0x38] sm:$0xff] %vm1123, %v1414
        %v1423 = vld [vmem:[#allocation3] sm:$0xf]
        %v1424 = vld [vmem:[#allocation3 + $0x4] sm:$0xf]
        %v1425 = vld [vmem:[#allocation3 + $0x8] sm:$0xf]
        %v1426 = vld [vmem:[#allocation3 + $0xc] sm:$0xf]
        %v1427 = vld [vmem:[#allocation3 + $0x10] sm:$0xf]
        %v1428 = vld [vmem:[#allocation3 + $0x14] sm:$0xf]
        %v1429 = vld [vmem:[#allocation3 + $0x18] sm:$0xf]
        %v1430 = vld [vmem:[#allocation3 + $0x1c] sm:$0xf]
        %1435 = vrot.lane.b32.xlu0 %v1075, 96
        %v1436 = vpop.permute.xlu0 %1435
        %1437 = vrot.lane.b32.xlu0 %v1076, 96
        %v1438 = vpop.permute.xlu0 %1437
        %1439 = vrot.lane.b32.xlu0 %v1077, 96
        %v1440 = vpop.permute.xlu0 %1439
        %1441 = vrot.lane.b32.xlu0 %v1078, 96
        %v1442 = vpop.permute.xlu0 %1441
        %v1451 = vunpack.c.l.b16 %v1423
        %v1452 = vunpack.c.l.b16 %v1424
        %v1453 = vunpack.c.l.b16 %v1425
        %v1454 = vunpack.c.l.b16 %v1426
        %v1455 = vunpack.c.l.b16 %v1427
        %v1456 = vunpack.c.l.b16 %v1428
        %v1457 = vunpack.c.l.b16 %v1429
        %v1458 = vunpack.c.l.b16 %v1430
        %v1459 = vpack.c.b16 %v1452, %v1451
        %v1460 = vpack.c.b16 %v1454, %v1453
        %v1461 = vpack.c.b16 %v1456, %v1455
        %v1462 = vpack.c.b16 %v1458, %v1457
        %1463 = vrot.lane.b32.xlu0 %v1459, 96
        %v1464 = vpop.permute.xlu0 %1463
        %1465 = vrot.lane.b32.xlu0 %v1460, 96
        %v1466 = vpop.permute.xlu0 %1465
        %1467 = vrot.lane.b32.xlu0 %v1461, 96
        %v1468 = vpop.permute.xlu0 %1467
        %1469 = vrot.lane.b32.xlu0 %v1462, 96
        %v1470 = vpop.permute.xlu0 %1469
        %v1472 = vsel %vm1123, %v1436, 0
        %v1475 = vsel %vm1123, %v1438, 0
        %v1478 = vsel %vm1123, %v1440, 0
        %v1481 = vsel %vm1123, %v1442, 0
        %v1484 = vsel %vm1123, %v1464, 0
        %v1487 = vsel %vm1123, %v1466, 0
        %v1490 = vsel %vm1123, %v1468, 0
        %v1493 = vsel %vm1123, %v1470, 0
        %1495 = vmatprep.subr.bf16.mxu0 0
        %1496 = vmatpush1.bf16.xpose.msra.mxu0 0
        %1497 = vmatprep.subr.bf16.mxu0 0
        %1498 = vmatpush1.bf16.xpose.msra.mxu0 0
        %1499 = vmatprep.subr.bf16.mxu0 0
        %1500 = vmatpush1.bf16.xpose.msra.mxu0 0
        %1501 = vmatprep.subr.bf16.mxu0 0
        %1502 = vmatpush1.bf16.xpose.msra.mxu0 0
        %1503 = vmatprep.subr.bf16.mxu0 0
        %1504 = vmatpush1.bf16.xpose.msra.mxu0 %v1493
        %1505 = vmatprep.subr.bf16.mxu0 0
        %1506 = vmatpush1.bf16.xpose.msra.mxu0 %v1490
        %1507 = vmatprep.subr.bf16.mxu0 0
        %1508 = vmatpush1.bf16.xpose.msra.mxu0 %v1487
        %1509 = vmatprep.subr.bf16.mxu0 0
        %1510 = vmatpush1.bf16.xpose.msra.mxu0 %v1484
        %1511 = vmatprep.subr.bf16.mxu0 0
        %1512 = vmatpush2.bf16.xpose.msra.mxu0 0
        %1513 = vmatprep.subr.bf16.mxu0 0
        %1514 = vmatpush2.bf16.xpose.msra.mxu0 0
        %1515 = vmatprep.subr.bf16.mxu0 0
        %1516 = vmatpush2.bf16.xpose.msra.mxu0 0
        %1517 = vmatprep.subr.bf16.mxu0 0
        %1518 = vmatpush2.bf16.xpose.msra.mxu0 0
        %1519 = vmatprep.subr.bf16.mxu0 0
        %1520 = vmatpush2.bf16.xpose.msra.mxu0 0
        %1521 = vmatprep.subr.bf16.mxu0 0
        %1522 = vmatpush2.bf16.xpose.msra.mxu0 0
        %1523 = vmatprep.subr.bf16.mxu0 0
        %1524 = vmatpush2.bf16.xpose.msra.mxu0 0
        %1525 = vmatprep.subr.bf16.mxu0 0
        %1526 = vmatpush2.bf16.xpose.msra.mxu0 0
        %1527 = vmatprep.mubr.bf16.mxu0 0
        %1528 = vmatmul.mubr.bf16.gmra.mxu0 %v1472
        %v1529 = vpop.f32.mrf.mxu0
        %v1530 = vadd.f32 %v1087, %v1529
        %v1531 = vpop.f32.mrf.mxu0
        %v1532 = vpop.f32.mrf.mxu0
        %v1533 = vadd.f32 %v1088, %v1532
        %v1534 = vpop.f32.mrf.mxu0
        %1535 = vmatprep.mubr.bf16.mxu0 0
        %1536 = vmatmul.mubr.bf16.gmra.mxu0 %v1475
        %v1537 = vpop.f32.mrf.mxu0
        %v1538 = vadd.f32 %v1089, %v1537
        %v1539 = vpop.f32.mrf.mxu0
        %v1540 = vpop.f32.mrf.mxu0
        %v1541 = vadd.f32 %v1090, %v1540
        %v1542 = vpop.f32.mrf.mxu0
        %1543 = vmatprep.mubr.bf16.mxu0 0
        %1544 = vmatmul.mubr.bf16.gmra.mxu0 %v1478
        %v1545 = vpop.f32.mrf.mxu0
        %v1546 = vadd.f32 %v1091, %v1545
        %v1547 = vpop.f32.mrf.mxu0
        %v1548 = vpop.f32.mrf.mxu0
        %v1549 = vadd.f32 %v1092, %v1548
        %v1550 = vpop.f32.mrf.mxu0
        %1551 = vmatprep.mubr.bf16.mxu0 0
        %1552 = vmatmul.mubr.bf16.gmra.mxu0 %v1481
        %v1553 = vpop.f32.mrf.mxu0
        %v1554 = vadd.f32 %v1093, %v1553
        %v1555 = vpop.f32.mrf.mxu0
        %v1556 = vpop.f32.mrf.mxu0
        %v1557 = vadd.f32 %v1094, %v1556
        %v1558 = vpop.f32.mrf.mxu0
        %1559 = vdwg.mxu0
        %v1560 = vsel %vm1213, %v1530, -inf
        %1561 = vmax.xlane.f32.xlu0 %v1560
        %v1562 = vpop.xlane.xlu0 %1561
        %v1563 = vsel %vm1213, %v1533, -inf
        %1564 = vmax.xlane.f32.xlu0 %v1563
        %v1565 = vpop.xlane.xlu0 %1564
        %v1566 = vsel %vm1213, %v1538, -inf
        %1567 = vmax.xlane.f32.xlu0 %v1566
        %v1568 = vpop.xlane.xlu0 %1567
        %v1569 = vsel %vm1213, %v1541, -inf
        %1570 = vmax.xlane.f32.xlu0 %v1569
        %v1571 = vpop.xlane.xlu0 %1570
        %v1572 = vsel %vm1213, %v1546, -inf
        %1573 = vmax.xlane.f32.xlu0 %v1572
        %v1574 = vpop.xlane.xlu0 %1573
        %v1575 = vsel %vm1213, %v1549, -inf
        %1576 = vmax.xlane.f32.xlu0 %v1575
        %v1577 = vpop.xlane.xlu0 %1576
        %v1578 = vsel %vm1213, %v1554, -inf
        %1579 = vmax.xlane.f32.xlu0 %v1578
        %v1580 = vpop.xlane.xlu0 %1579
        %v1581 = vsel %vm1213, %v1557, -inf
        %1582 = vmax.xlane.f32.xlu0 %v1581
        %v1583 = vpop.xlane.xlu0 %1582
        %v1584 = vsub.f32 %v1530, %v1562
        %v1585 = vsub.f32 %v1533, %v1565
        %v1586 = vsub.f32 %v1538, %v1568
        %v1587 = vsub.f32 %v1541, %v1571
        %v1588 = vsub.f32 %v1546, %v1574
        %v1589 = vsub.f32 %v1549, %v1577
        %v1590 = vsub.f32 %v1554, %v1580
        %v1591 = vsub.f32 %v1557, %v1583
        %v1592 = vmul.f32 %v1584, 1.442695
        %v1593 = vpow.pop %v1592
        %v1594 = vmul.f32 %v1585, 1.442695
        %v1595 = vpow.pop %v1594
        %v1596 = vmul.f32 %v1586, 1.442695
        %v1597 = vpow.pop %v1596
        %v1598 = vmul.f32 %v1587, 1.442695
        %v1599 = vpow.pop %v1598
        %v1600 = vmul.f32 %v1588, 1.442695
        %v1601 = vpow.pop %v1600
        %v1602 = vmul.f32 %v1589, 1.442695
        %v1603 = vpow.pop %v1602
        %v1604 = vmul.f32 %v1590, 1.442695
        %v1605 = vpow.pop %v1604
        %v1606 = vmul.f32 %v1591, 1.442695
        %v1607 = vpow.pop %v1606
        %v1608 = vsel %vm1213, %v1593, 0.0
        %1609 = vadd.xlane.f32.xlu0 %v1608
        %v1610 = vpop.xlane.xlu0 %1609
        %v1611 = vsel %vm1213, %v1595, 0.0
        %1612 = vadd.xlane.f32.xlu0 %v1611
        %v1613 = vpop.xlane.xlu0 %1612
        %v1614 = vsel %vm1213, %v1597, 0.0
        %1615 = vadd.xlane.f32.xlu0 %v1614
        %v1616 = vpop.xlane.xlu0 %1615
        %v1617 = vsel %vm1213, %v1599, 0.0
        %1618 = vadd.xlane.f32.xlu0 %v1617
        %v1619 = vpop.xlane.xlu0 %1618
        %v1620 = vsel %vm1213, %v1601, 0.0
        %1621 = vadd.xlane.f32.xlu0 %v1620
        %v1622 = vpop.xlane.xlu0 %1621
        %v1623 = vsel %vm1213, %v1603, 0.0
        %1624 = vadd.xlane.f32.xlu0 %v1623
        %v1625 = vpop.xlane.xlu0 %1624
        %v1626 = vsel %vm1213, %v1605, 0.0
        %1627 = vadd.xlane.f32.xlu0 %v1626
        %v1628 = vpop.xlane.xlu0 %1627
        %v1629 = vsel %vm1213, %v1607, 0.0
        %1630 = vadd.xlane.f32.xlu0 %v1629
        %v1631 = vpop.xlane.xlu0 %1630
        %v1632 = vrcp.pop %v1610
        %v1633 = vrcp.pop %v1613
        %v1634 = vrcp.pop %v1616
        %v1635 = vrcp.pop %v1619
        %v1636 = vrcp.pop %v1622
        %v1637 = vrcp.pop %v1625
        %v1638 = vrcp.pop %v1628
        %v1639 = vrcp.pop %v1631
        %v1640 = vpack.c.bf16 %v1595, %v1593
        %v1641 = vpack.c.bf16 %v1599, %v1597
        %v1642 = vpack.c.bf16 %v1603, %v1601
        %v1643 = vpack.c.bf16 %v1607, %v1605
        %v1644 = vld [vmem:[#allocation4] sm:$0xf]
        %v1645 = vld [vmem:[#allocation4 + $0x4] sm:$0xf]
        %v1646 = vld [vmem:[#allocation4 + $0x8] sm:$0xf]
        %v1647 = vld [vmem:[#allocation4 + $0xc] sm:$0xf]
        %v1648 = vld [vmem:[#allocation4 + $0x10] sm:$0xf]
        %v1649 = vld [vmem:[#allocation4 + $0x14] sm:$0xf]
        %v1650 = vld [vmem:[#allocation4 + $0x18] sm:$0xf]
        %v1651 = vld [vmem:[#allocation4 + $0x1c] sm:$0xf]
        %v1660 = vunpack.c.l.b16 %v1644
        %v1661 = vunpack.c.l.b16 %v1645
        %v1662 = vunpack.c.l.b16 %v1646
        %v1663 = vunpack.c.l.b16 %v1647
        %v1664 = vunpack.c.l.b16 %v1648
        %v1665 = vunpack.c.l.b16 %v1649
        %v1666 = vunpack.c.l.b16 %v1650
        %v1667 = vunpack.c.l.b16 %v1651
        %v1668 = vpack.c.b16 %v1661, %v1660
        %v1669 = vpack.c.b16 %v1663, %v1662
        %v1670 = vpack.c.b16 %v1665, %v1664
        %v1671 = vpack.c.b16 %v1667, %v1666
        %1672 = vrot.lane.b32.xlu0 %v1668, 96
        %v1673 = vpop.permute.xlu0 %1672
        %1674 = vrot.lane.b32.xlu0 %v1669, 96
        %v1675 = vpop.permute.xlu0 %1674
        %1676 = vrot.lane.b32.xlu0 %v1670, 96
        %v1677 = vpop.permute.xlu0 %1676
        %1678 = vrot.lane.b32.xlu0 %v1671, 96
        %v1679 = vpop.permute.xlu0 %1678
        %v1685 = vsel %vm1213, %v1640, 0
        %v1688 = vsel %vm1213, %v1641, 0
        %v1691 = vsel %vm1213, %v1642, 0
        %v1694 = vsel %vm1213, %v1643, 0
        %1696 = vmatprep.subr.bf16.mxu0 0
        %1697 = vmatpush1.bf16.msra.mxu0 0
        %1698 = vmatprep.subr.bf16.mxu0 0
        %1699 = vmatpush1.bf16.msra.mxu0 0
        %1700 = vmatprep.subr.bf16.mxu0 0
        %1701 = vmatpush1.bf16.msra.mxu0 0
        %1702 = vmatprep.subr.bf16.mxu0 0
        %1703 = vmatpush1.bf16.msra.mxu0 0
        %1704 = vmatprep.subr.bf16.mxu0 0
        %1705 = vmatpush1.bf16.msra.mxu0 %v1679
        %1706 = vmatprep.subr.bf16.mxu0 0
        %1707 = vmatpush1.bf16.msra.mxu0 %v1677
        %1708 = vmatprep.subr.bf16.mxu0 0
        %1709 = vmatpush1.bf16.msra.mxu0 %v1675
        %1710 = vmatprep.subr.bf16.mxu0 0
        %1711 = vmatpush1.bf16.msra.mxu0 %v1673
        %1712 = vmatprep.subr.bf16.mxu0 0
        %1713 = vmatpush2.bf16.msra.mxu0 0
        %1714 = vmatprep.subr.bf16.mxu0 0
        %1715 = vmatpush2.bf16.msra.mxu0 0
        %1716 = vmatprep.subr.bf16.mxu0 0
        %1717 = vmatpush2.bf16.msra.mxu0 0
        %1718 = vmatprep.subr.bf16.mxu0 0
        %1719 = vmatpush2.bf16.msra.mxu0 0
        %1720 = vmatprep.subr.bf16.mxu0 0
        %1721 = vmatpush2.bf16.msra.mxu0 0
        %1722 = vmatprep.subr.bf16.mxu0 0
        %1723 = vmatpush2.bf16.msra.mxu0 0
        %1724 = vmatprep.subr.bf16.mxu0 0
        %1725 = vmatpush2.bf16.msra.mxu0 0
        %1726 = vmatprep.subr.bf16.mxu0 0
        %1727 = vmatpush2.bf16.msra.mxu0 0
        %1728 = vmatprep.mubr.bf16.mxu0 0
        %1729 = vmatmul.mubr.bf16.gmra.mxu0 %v1685
        %v1730 = vpop.f32.mrf.mxu0
        %v1731 = vadd.f32 0.0, %v1730
        %v1732 = vpop.f32.mrf.mxu0
        %v1733 = vpop.f32.mrf.mxu0
        %v1734 = vadd.f32 0.0, %v1733
        %v1735 = vpop.f32.mrf.mxu0
        %1736 = vmatprep.mubr.bf16.mxu0 0
        %1737 = vmatmul.mubr.bf16.gmra.mxu0 %v1688
        %v1738 = vpop.f32.mrf.mxu0
        %v1739 = vadd.f32 0.0, %v1738
        %v1740 = vpop.f32.mrf.mxu0
        %v1741 = vpop.f32.mrf.mxu0
        %v1742 = vadd.f32 0.0, %v1741
        %v1743 = vpop.f32.mrf.mxu0
        %1744 = vmatprep.mubr.bf16.mxu0 0
        %1745 = vmatmul.mubr.bf16.gmra.mxu0 %v1691
        %v1746 = vpop.f32.mrf.mxu0
        %v1747 = vadd.f32 0.0, %v1746
        %v1748 = vpop.f32.mrf.mxu0
        %v1749 = vpop.f32.mrf.mxu0
        %v1750 = vadd.f32 0.0, %v1749
        %v1751 = vpop.f32.mrf.mxu0
        %1752 = vmatprep.mubr.bf16.mxu0 0
        %1753 = vmatmul.mubr.bf16.gmra.mxu0 %v1694
        %v1754 = vpop.f32.mrf.mxu0
        %v1755 = vadd.f32 0.0, %v1754
        %v1756 = vpop.f32.mrf.mxu0
        %v1757 = vpop.f32.mrf.mxu0
        %v1758 = vadd.f32 0.0, %v1757
        %v1759 = vpop.f32.mrf.mxu0
        %1760 = vdwg.mxu0
        %v1761 = vmul.f32 %v1731, %v1632
        %v1762 = vmul.f32 %v1734, %v1633
        %v1763 = vmul.f32 %v1739, %v1634
        %v1764 = vmul.f32 %v1742, %v1635
        %v1765 = vmul.f32 %v1747, %v1636
        %v1766 = vmul.f32 %v1750, %v1637
        %v1767 = vmul.f32 %v1755, %v1638
        %v1768 = vmul.f32 %v1758, %v1639
        %1777 = vrot.lane.b32.xlu0 %v1761, 32
        %v1778 = vpop.permute.xlu0 %1777
        %1779 = vrot.lane.b32.xlu0 %v1762, 32
        %v1780 = vpop.permute.xlu0 %1779
        %1781 = vrot.lane.b32.xlu0 %v1763, 32
        %v1782 = vpop.permute.xlu0 %1781
        %1783 = vrot.lane.b32.xlu0 %v1764, 32
        %v1784 = vpop.permute.xlu0 %1783
        %1785 = vrot.lane.b32.xlu0 %v1765, 32
        %v1786 = vpop.permute.xlu0 %1785
        %1787 = vrot.lane.b32.xlu0 %v1766, 32
        %v1788 = vpop.permute.xlu0 %1787
        %1789 = vrot.lane.b32.xlu0 %v1767, 32
        %v1790 = vpop.permute.xlu0 %1789
        %1791 = vrot.lane.b32.xlu0 %v1768, 32
        %v1792 = vpop.permute.xlu0 %1791
        %vm1801 = vcmask 523520
        %1802 = vst.msk [vmem:[#allocation2] sm:$0xff] %vm1801, %v1778
        %1803 = vst.msk [vmem:[#allocation2 + $0x8] sm:$0xff] %vm1801, %v1780
        %1804 = vst.msk [vmem:[#allocation2 + $0x10] sm:$0xff] %vm1801, %v1782
        %1805 = vst.msk [vmem:[#allocation2 + $0x18] sm:$0xff] %vm1801, %v1784
        %1806 = vst.msk [vmem:[#allocation2 + $0x20] sm:$0xff] %vm1801, %v1786
        %1807 = vst.msk [vmem:[#allocation2 + $0x28] sm:$0xff] %vm1801, %v1788
        %1808 = vst.msk [vmem:[#allocation2 + $0x30] sm:$0xff] %vm1801, %v1790
        %1809 = vst.msk [vmem:[#allocation2 + $0x38] sm:$0xff] %vm1801, %v1792
        %v1810 = vld [vmem:[#allocation3] sm:$0xf]
        %v1811 = vld [vmem:[#allocation3 + $0x4] sm:$0xf]
        %v1812 = vld [vmem:[#allocation3 + $0x8] sm:$0xf]
        %v1813 = vld [vmem:[#allocation3 + $0xc] sm:$0xf]
        %v1814 = vld [vmem:[#allocation3 + $0x10] sm:$0xf]
        %v1815 = vld [vmem:[#allocation3 + $0x14] sm:$0xf]
        %v1816 = vld [vmem:[#allocation3 + $0x18] sm:$0xf]
        %v1817 = vld [vmem:[#allocation3 + $0x1c] sm:$0xf]
        %1818 = vrot.lane.b32.xlu0 %v1075, 64
        %v1819 = vpop.permute.xlu0 %1818
        %1820 = vrot.lane.b32.xlu0 %v1076, 64
        %v1821 = vpop.permute.xlu0 %1820
        %1822 = vrot.lane.b32.xlu0 %v1077, 64
        %v1823 = vpop.permute.xlu0 %1822
        %1824 = vrot.lane.b32.xlu0 %v1078, 64
        %v1825 = vpop.permute.xlu0 %1824
        %v1834 = vunpack.c.l.b16 %v1810
        %v1835 = vunpack.c.l.b16 %v1811
        %v1836 = vunpack.c.l.b16 %v1812
        %v1837 = vunpack.c.l.b16 %v1813
        %v1838 = vunpack.c.l.b16 %v1814
        %v1839 = vunpack.c.l.b16 %v1815
        %v1840 = vunpack.c.l.b16 %v1816
        %v1841 = vunpack.c.l.b16 %v1817
        %v1842 = vpack.c.b16 %v1835, %v1834
        %v1843 = vpack.c.b16 %v1837, %v1836
        %v1844 = vpack.c.b16 %v1839, %v1838
        %v1845 = vpack.c.b16 %v1841, %v1840
        %1846 = vrot.lane.b32.xlu0 %v1842, 64
        %v1847 = vpop.permute.xlu0 %1846
        %1848 = vrot.lane.b32.xlu0 %v1843, 64
        %v1849 = vpop.permute.xlu0 %1848
        %1850 = vrot.lane.b32.xlu0 %v1844, 64
        %v1851 = vpop.permute.xlu0 %1850
        %1852 = vrot.lane.b32.xlu0 %v1845, 64
        %v1853 = vpop.permute.xlu0 %1852
        %v1855 = vsel %vm1123, %v1819, 0
        %v1858 = vsel %vm1123, %v1821, 0
        %v1861 = vsel %vm1123, %v1823, 0
        %v1864 = vsel %vm1123, %v1825, 0
        %v1867 = vsel %vm1123, %v1847, 0
        %v1870 = vsel %vm1123, %v1849, 0
        %v1873 = vsel %vm1123, %v1851, 0
        %v1876 = vsel %vm1123, %v1853, 0
        %1878 = vmatprep.subr.bf16.mxu0 0
        %1879 = vmatpush1.bf16.xpose.msra.mxu0 0
        %1880 = vmatprep.subr.bf16.mxu0 0
        %1881 = vmatpush1.bf16.xpose.msra.mxu0 0
        %1882 = vmatprep.subr.bf16.mxu0 0
        %1883 = vmatpush1.bf16.xpose.msra.mxu0 0
        %1884 = vmatprep.subr.bf16.mxu0 0
        %1885 = vmatpush1.bf16.xpose.msra.mxu0 0
        %1886 = vmatprep.subr.bf16.mxu0 0
        %1887 = vmatpush1.bf16.xpose.msra.mxu0 %v1876
        %1888 = vmatprep.subr.bf16.mxu0 0
        %1889 = vmatpush1.bf16.xpose.msra.mxu0 %v1873
        %1890 = vmatprep.subr.bf16.mxu0 0
        %1891 = vmatpush1.bf16.xpose.msra.mxu0 %v1870
        %1892 = vmatprep.subr.bf16.mxu0 0
        %1893 = vmatpush1.bf16.xpose.msra.mxu0 %v1867
        %1894 = vmatprep.subr.bf16.mxu0 0
        %1895 = vmatpush2.bf16.xpose.msra.mxu0 0
        %1896 = vmatprep.subr.bf16.mxu0 0
        %1897 = vmatpush2.bf16.xpose.msra.mxu0 0
        %1898 = vmatprep.subr.bf16.mxu0 0
        %1899 = vmatpush2.bf16.xpose.msra.mxu0 0
        %1900 = vmatprep.subr.bf16.mxu0 0
        %1901 = vmatpush2.bf16.xpose.msra.mxu0 0
        %1902 = vmatprep.subr.bf16.mxu0 0
        %1903 = vmatpush2.bf16.xpose.msra.mxu0 0
        %1904 = vmatprep.subr.bf16.mxu0 0
        %1905 = vmatpush2.bf16.xpose.msra.mxu0 0
        %1906 = vmatprep.subr.bf16.mxu0 0
        %1907 = vmatpush2.bf16.xpose.msra.mxu0 0
        %1908 = vmatprep.subr.bf16.mxu0 0
        %1909 = vmatpush2.bf16.xpose.msra.mxu0 0
        %1910 = vmatprep.mubr.bf16.mxu0 0
        %1911 = vmatmul.mubr.bf16.gmra.mxu0 %v1855
        %v1912 = vpop.f32.mrf.mxu0
        %v1913 = vadd.f32 %v1087, %v1912
        %v1914 = vpop.f32.mrf.mxu0
        %v1915 = vpop.f32.mrf.mxu0
        %v1916 = vadd.f32 %v1088, %v1915
        %v1917 = vpop.f32.mrf.mxu0
        %1918 = vmatprep.mubr.bf16.mxu0 0
        %1919 = vmatmul.mubr.bf16.gmra.mxu0 %v1858
        %v1920 = vpop.f32.mrf.mxu0
        %v1921 = vadd.f32 %v1089, %v1920
        %v1922 = vpop.f32.mrf.mxu0
        %v1923 = vpop.f32.mrf.mxu0
        %v1924 = vadd.f32 %v1090, %v1923
        %v1925 = vpop.f32.mrf.mxu0
        %1926 = vmatprep.mubr.bf16.mxu0 0
        %1927 = vmatmul.mubr.bf16.gmra.mxu0 %v1861
        %v1928 = vpop.f32.mrf.mxu0
        %v1929 = vadd.f32 %v1091, %v1928
        %v1930 = vpop.f32.mrf.mxu0
        %v1931 = vpop.f32.mrf.mxu0
        %v1932 = vadd.f32 %v1092, %v1931
        %v1933 = vpop.f32.mrf.mxu0
        %1934 = vmatprep.mubr.bf16.mxu0 0
        %1935 = vmatmul.mubr.bf16.gmra.mxu0 %v1864
        %v1936 = vpop.f32.mrf.mxu0
        %v1937 = vadd.f32 %v1093, %v1936
        %v1938 = vpop.f32.mrf.mxu0
        %v1939 = vpop.f32.mrf.mxu0
        %v1940 = vadd.f32 %v1094, %v1939
        %v1941 = vpop.f32.mrf.mxu0
        %1942 = vdwg.mxu0
        %v1943 = vsel %vm1213, %v1913, -inf
        %1944 = vmax.xlane.f32.xlu0 %v1943
        %v1945 = vpop.xlane.xlu0 %1944
        %v1946 = vsel %vm1213, %v1916, -inf
        %1947 = vmax.xlane.f32.xlu0 %v1946
        %v1948 = vpop.xlane.xlu0 %1947
        %v1949 = vsel %vm1213, %v1921, -inf
        %1950 = vmax.xlane.f32.xlu0 %v1949
        %v1951 = vpop.xlane.xlu0 %1950
        %v1952 = vsel %vm1213, %v1924, -inf
        %1953 = vmax.xlane.f32.xlu0 %v1952
        %v1954 = vpop.xlane.xlu0 %1953
        %v1955 = vsel %vm1213, %v1929, -inf
        %1956 = vmax.xlane.f32.xlu0 %v1955
        %v1957 = vpop.xlane.xlu0 %1956
        %v1958 = vsel %vm1213, %v1932, -inf
        %1959 = vmax.xlane.f32.xlu0 %v1958
        %v1960 = vpop.xlane.xlu0 %1959
        %v1961 = vsel %vm1213, %v1937, -inf
        %1962 = vmax.xlane.f32.xlu0 %v1961
        %v1963 = vpop.xlane.xlu0 %1962
        %v1964 = vsel %vm1213, %v1940, -inf
        %1965 = vmax.xlane.f32.xlu0 %v1964
        %v1966 = vpop.xlane.xlu0 %1965
        %v1967 = vsub.f32 %v1913, %v1945
        %v1968 = vsub.f32 %v1916, %v1948
        %v1969 = vsub.f32 %v1921, %v1951
        %v1970 = vsub.f32 %v1924, %v1954
        %v1971 = vsub.f32 %v1929, %v1957
        %v1972 = vsub.f32 %v1932, %v1960
        %v1973 = vsub.f32 %v1937, %v1963
        %v1974 = vsub.f32 %v1940, %v1966
        %v1975 = vmul.f32 %v1967, 1.442695
        %v1976 = vpow.pop %v1975
        %v1977 = vmul.f32 %v1968, 1.442695
        %v1978 = vpow.pop %v1977
        %v1979 = vmul.f32 %v1969, 1.442695
        %v1980 = vpow.pop %v1979
        %v1981 = vmul.f32 %v1970, 1.442695
        %v1982 = vpow.pop %v1981
        %v1983 = vmul.f32 %v1971, 1.442695
        %v1984 = vpow.pop %v1983
        %v1985 = vmul.f32 %v1972, 1.442695
        %v1986 = vpow.pop %v1985
        %v1987 = vmul.f32 %v1973, 1.442695
        %v1988 = vpow.pop %v1987
        %v1989 = vmul.f32 %v1974, 1.442695
        %v1990 = vpow.pop %v1989
        %v1991 = vsel %vm1213, %v1976, 0.0
        %1992 = vadd.xlane.f32.xlu0 %v1991
        %v1993 = vpop.xlane.xlu0 %1992
        %v1994 = vsel %vm1213, %v1978, 0.0
        %1995 = vadd.xlane.f32.xlu0 %v1994
        %v1996 = vpop.xlane.xlu0 %1995
        %v1997 = vsel %vm1213, %v1980, 0.0
        %1998 = vadd.xlane.f32.xlu0 %v1997
        %v1999 = vpop.xlane.xlu0 %1998
        %v2000 = vsel %vm1213, %v1982, 0.0
        %2001 = vadd.xlane.f32.xlu0 %v2000
        %v2002 = vpop.xlane.xlu0 %2001
        %v2003 = vsel %vm1213, %v1984, 0.0
        %2004 = vadd.xlane.f32.xlu0 %v2003
        %v2005 = vpop.xlane.xlu0 %2004
        %v2006 = vsel %vm1213, %v1986, 0.0
        %2007 = vadd.xlane.f32.xlu0 %v2006
        %v2008 = vpop.xlane.xlu0 %2007
        %v2009 = vsel %vm1213, %v1988, 0.0
        %2010 = vadd.xlane.f32.xlu0 %v2009
        %v2011 = vpop.xlane.xlu0 %2010
        %v2012 = vsel %vm1213, %v1990, 0.0
        %2013 = vadd.xlane.f32.xlu0 %v2012
        %v2014 = vpop.xlane.xlu0 %2013
        %v2015 = vrcp.pop %v1993
        %v2016 = vrcp.pop %v1996
        %v2017 = vrcp.pop %v1999
        %v2018 = vrcp.pop %v2002
        %v2019 = vrcp.pop %v2005
        %v2020 = vrcp.pop %v2008
        %v2021 = vrcp.pop %v2011
        %v2022 = vrcp.pop %v2014
        %v2023 = vpack.c.bf16 %v1978, %v1976
        %v2024 = vpack.c.bf16 %v1982, %v1980
        %v2025 = vpack.c.bf16 %v1986, %v1984
        %v2026 = vpack.c.bf16 %v1990, %v1988
        %v2027 = vld [vmem:[#allocation4] sm:$0xf]
        %v2028 = vld [vmem:[#allocation4 + $0x4] sm:$0xf]
        %v2029 = vld [vmem:[#allocation4 + $0x8] sm:$0xf]
        %v2030 = vld [vmem:[#allocation4 + $0xc] sm:$0xf]
        %v2031 = vld [vmem:[#allocation4 + $0x10] sm:$0xf]
        %v2032 = vld [vmem:[#allocation4 + $0x14] sm:$0xf]
        %v2033 = vld [vmem:[#allocation4 + $0x18] sm:$0xf]
        %v2034 = vld [vmem:[#allocation4 + $0x1c] sm:$0xf]
        %v2043 = vunpack.c.l.b16 %v2027
        %v2044 = vunpack.c.l.b16 %v2028
        %v2045 = vunpack.c.l.b16 %v2029
        %v2046 = vunpack.c.l.b16 %v2030
        %v2047 = vunpack.c.l.b16 %v2031
        %v2048 = vunpack.c.l.b16 %v2032
        %v2049 = vunpack.c.l.b16 %v2033
        %v2050 = vunpack.c.l.b16 %v2034
        %v2051 = vpack.c.b16 %v2044, %v2043
        %v2052 = vpack.c.b16 %v2046, %v2045
        %v2053 = vpack.c.b16 %v2048, %v2047
        %v2054 = vpack.c.b16 %v2050, %v2049
        %2055 = vrot.lane.b32.xlu0 %v2051, 64
        %v2056 = vpop.permute.xlu0 %2055
        %2057 = vrot.lane.b32.xlu0 %v2052, 64
        %v2058 = vpop.permute.xlu0 %2057
        %2059 = vrot.lane.b32.xlu0 %v2053, 64
        %v2060 = vpop.permute.xlu0 %2059
        %2061 = vrot.lane.b32.xlu0 %v2054, 64
        %v2062 = vpop.permute.xlu0 %2061
        %v2068 = vsel %vm1213, %v2023, 0
        %v2071 = vsel %vm1213, %v2024, 0
        %v2074 = vsel %vm1213, %v2025, 0
        %v2077 = vsel %vm1213, %v2026, 0
        %2079 = vmatprep.subr.bf16.mxu0 0
        %2080 = vmatpush1.bf16.msra.mxu0 0
        %2081 = vmatprep.subr.bf16.mxu0 0
        %2082 = vmatpush1.bf16.msra.mxu0 0
        %2083 = vmatprep.subr.bf16.mxu0 0
        %2084 = vmatpush1.bf16.msra.mxu0 0
        %2085 = vmatprep.subr.bf16.mxu0 0
        %2086 = vmatpush1.bf16.msra.mxu0 0
        %2087 = vmatprep.subr.bf16.mxu0 0
        %2088 = vmatpush1.bf16.msra.mxu0 %v2062
        %2089 = vmatprep.subr.bf16.mxu0 0
        %2090 = vmatpush1.bf16.msra.mxu0 %v2060
        %2091 = vmatprep.subr.bf16.mxu0 0
        %2092 = vmatpush1.bf16.msra.mxu0 %v2058
        %2093 = vmatprep.subr.bf16.mxu0 0
        %2094 = vmatpush1.bf16.msra.mxu0 %v2056
        %2095 = vmatprep.subr.bf16.mxu0 0
        %2096 = vmatpush2.bf16.msra.mxu0 0
        %2097 = vmatprep.subr.bf16.mxu0 0
        %2098 = vmatpush2.bf16.msra.mxu0 0
        %2099 = vmatprep.subr.bf16.mxu0 0
        %2100 = vmatpush2.bf16.msra.mxu0 0
        %2101 = vmatprep.subr.bf16.mxu0 0
        %2102 = vmatpush2.bf16.msra.mxu0 0
        %2103 = vmatprep.subr.bf16.mxu0 0
        %2104 = vmatpush2.bf16.msra.mxu0 0
        %2105 = vmatprep.subr.bf16.mxu0 0
        %2106 = vmatpush2.bf16.msra.mxu0 0
        %2107 = vmatprep.subr.bf16.mxu0 0
        %2108 = vmatpush2.bf16.msra.mxu0 0
        %2109 = vmatprep.subr.bf16.mxu0 0
        %2110 = vmatpush2.bf16.msra.mxu0 0
        %2111 = vmatprep.mubr.bf16.mxu0 0
        %2112 = vmatmul.mubr.bf16.gmra.mxu0 %v2068
        %v2113 = vpop.f32.mrf.mxu0
        %v2114 = vadd.f32 0.0, %v2113
        %v2115 = vpop.f32.mrf.mxu0
        %v2116 = vpop.f32.mrf.mxu0
        %v2117 = vadd.f32 0.0, %v2116
        %v2118 = vpop.f32.mrf.mxu0
        %2119 = vmatprep.mubr.bf16.mxu0 0
        %2120 = vmatmul.mubr.bf16.gmra.mxu0 %v2071
        %v2121 = vpop.f32.mrf.mxu0
        %v2122 = vadd.f32 0.0, %v2121
        %v2123 = vpop.f32.mrf.mxu0
        %v2124 = vpop.f32.mrf.mxu0
        %v2125 = vadd.f32 0.0, %v2124
        %v2126 = vpop.f32.mrf.mxu0
        %2127 = vmatprep.mubr.bf16.mxu0 0
        %2128 = vmatmul.mubr.bf16.gmra.mxu0 %v2074
        %v2129 = vpop.f32.mrf.mxu0
        %v2130 = vadd.f32 0.0, %v2129
        %v2131 = vpop.f32.mrf.mxu0
        %v2132 = vpop.f32.mrf.mxu0
        %v2133 = vadd.f32 0.0, %v2132
        %v2134 = vpop.f32.mrf.mxu0
        %2135 = vmatprep.mubr.bf16.mxu0 0
        %2136 = vmatmul.mubr.bf16.gmra.mxu0 %v2077
        %v2137 = vpop.f32.mrf.mxu0
        %v2138 = vadd.f32 0.0, %v2137
        %v2139 = vpop.f32.mrf.mxu0
        %v2140 = vpop.f32.mrf.mxu0
        %v2141 = vadd.f32 0.0, %v2140
        %v2142 = vpop.f32.mrf.mxu0
        %2143 = vdwg.mxu0
        %v2144 = vmul.f32 %v2114, %v2015
        %v2145 = vmul.f32 %v2117, %v2016
        %v2146 = vmul.f32 %v2122, %v2017
        %v2147 = vmul.f32 %v2125, %v2018
        %v2148 = vmul.f32 %v2130, %v2019
        %v2149 = vmul.f32 %v2133, %v2020
        %v2150 = vmul.f32 %v2138, %v2021
        %v2151 = vmul.f32 %v2141, %v2022
        %2160 = vrot.lane.b32.xlu0 %v2144, 64
        %v2161 = vpop.permute.xlu0 %2160
        %2162 = vrot.lane.b32.xlu0 %v2145, 64
        %v2163 = vpop.permute.xlu0 %2162
        %2164 = vrot.lane.b32.xlu0 %v2146, 64
        %v2165 = vpop.permute.xlu0 %2164
        %2166 = vrot.lane.b32.xlu0 %v2147, 64
        %v2167 = vpop.permute.xlu0 %2166
        %2168 = vrot.lane.b32.xlu0 %v2148, 64
        %v2169 = vpop.permute.xlu0 %2168
        %2170 = vrot.lane.b32.xlu0 %v2149, 64
        %v2171 = vpop.permute.xlu0 %2170
        %2172 = vrot.lane.b32.xlu0 %v2150, 64
        %v2173 = vpop.permute.xlu0 %2172
        %2174 = vrot.lane.b32.xlu0 %v2151, 64
        %v2175 = vpop.permute.xlu0 %2174
        %vm2184 = vcmask 785920
        %2185 = vst.msk [vmem:[#allocation2] sm:$0xff] %vm2184, %v2161
        %2186 = vst.msk [vmem:[#allocation2 + $0x8] sm:$0xff] %vm2184, %v2163
        %2187 = vst.msk [vmem:[#allocation2 + $0x10] sm:$0xff] %vm2184, %v2165
        %2188 = vst.msk [vmem:[#allocation2 + $0x18] sm:$0xff] %vm2184, %v2167
        %2189 = vst.msk [vmem:[#allocation2 + $0x20] sm:$0xff] %vm2184, %v2169
        %2190 = vst.msk [vmem:[#allocation2 + $0x28] sm:$0xff] %vm2184, %v2171
        %2191 = vst.msk [vmem:[#allocation2 + $0x30] sm:$0xff] %vm2184, %v2173
        %2192 = vst.msk [vmem:[#allocation2 + $0x38] sm:$0xff] %vm2184, %v2175
        %v2193 = vld [vmem:[#allocation3] sm:$0xf]
        %v2194 = vld [vmem:[#allocation3 + $0x4] sm:$0xf]
        %v2195 = vld [vmem:[#allocation3 + $0x8] sm:$0xf]
        %v2196 = vld [vmem:[#allocation3 + $0xc] sm:$0xf]
        %v2197 = vld [vmem:[#allocation3 + $0x10] sm:$0xf]
        %v2198 = vld [vmem:[#allocation3 + $0x14] sm:$0xf]
        %v2199 = vld [vmem:[#allocation3 + $0x18] sm:$0xf]
        %v2200 = vld [vmem:[#allocation3 + $0x1c] sm:$0xf]
        %2201 = vrot.lane.b32.xlu0 %v1075, 32
        %v2202 = vpop.permute.xlu0 %2201
        %2203 = vrot.lane.b32.xlu0 %v1076, 32
        %v2204 = vpop.permute.xlu0 %2203
        %2205 = vrot.lane.b32.xlu0 %v1077, 32
        %v2206 = vpop.permute.xlu0 %2205
        %2207 = vrot.lane.b32.xlu0 %v1078, 32
        %v2208 = vpop.permute.xlu0 %2207
        %v2217 = vunpack.c.l.b16 %v2193
        %v2218 = vunpack.c.l.b16 %v2194
        %v2219 = vunpack.c.l.b16 %v2195
        %v2220 = vunpack.c.l.b16 %v2196
        %v2221 = vunpack.c.l.b16 %v2197
        %v2222 = vunpack.c.l.b16 %v2198
        %v2223 = vunpack.c.l.b16 %v2199
        %v2224 = vunpack.c.l.b16 %v2200
        %v2225 = vpack.c.b16 %v2218, %v2217
        %v2226 = vpack.c.b16 %v2220, %v2219
        %v2227 = vpack.c.b16 %v2222, %v2221
        %v2228 = vpack.c.b16 %v2224, %v2223
        %2229 = vrot.lane.b32.xlu0 %v2225, 32
        %v2230 = vpop.permute.xlu0 %2229
        %2231 = vrot.lane.b32.xlu0 %v2226, 32
        %v2232 = vpop.permute.xlu0 %2231
        %2233 = vrot.lane.b32.xlu0 %v2227, 32
        %v2234 = vpop.permute.xlu0 %2233
        %2235 = vrot.lane.b32.xlu0 %v2228, 32
        %v2236 = vpop.permute.xlu0 %2235
        %v2238 = vsel %vm1123, %v2202, 0
        %v2241 = vsel %vm1123, %v2204, 0
        %v2244 = vsel %vm1123, %v2206, 0
        %v2247 = vsel %vm1123, %v2208, 0
        %v2250 = vsel %vm1123, %v2230, 0
        %v2253 = vsel %vm1123, %v2232, 0
        %v2256 = vsel %vm1123, %v2234, 0
        %v2259 = vsel %vm1123, %v2236, 0
        %2261 = vmatprep.subr.bf16.mxu0 0
        %2262 = vmatpush1.bf16.xpose.msra.mxu0 0
        %2263 = vmatprep.subr.bf16.mxu0 0
        %2264 = vmatpush1.bf16.xpose.msra.mxu0 0
        %2265 = vmatprep.subr.bf16.mxu0 0
        %2266 = vmatpush1.bf16.xpose.msra.mxu0 0
        %2267 = vmatprep.subr.bf16.mxu0 0
        %2268 = vmatpush1.bf16.xpose.msra.mxu0 0
        %2269 = vmatprep.subr.bf16.mxu0 0
        %2270 = vmatpush1.bf16.xpose.msra.mxu0 %v2259
        %2271 = vmatprep.subr.bf16.mxu0 0
        %2272 = vmatpush1.bf16.xpose.msra.mxu0 %v2256
        %2273 = vmatprep.subr.bf16.mxu0 0
        %2274 = vmatpush1.bf16.xpose.msra.mxu0 %v2253
        %2275 = vmatprep.subr.bf16.mxu0 0
        %2276 = vmatpush1.bf16.xpose.msra.mxu0 %v2250
        %2277 = vmatprep.subr.bf16.mxu0 0
        %2278 = vmatpush2.bf16.xpose.msra.mxu0 0
        %2279 = vmatprep.subr.bf16.mxu0 0
        %2280 = vmatpush2.bf16.xpose.msra.mxu0 0
        %2281 = vmatprep.subr.bf16.mxu0 0
        %2282 = vmatpush2.bf16.xpose.msra.mxu0 0
        %2283 = vmatprep.subr.bf16.mxu0 0
        %2284 = vmatpush2.bf16.xpose.msra.mxu0 0
        %2285 = vmatprep.subr.bf16.mxu0 0
        %2286 = vmatpush2.bf16.xpose.msra.mxu0 0
        %2287 = vmatprep.subr.bf16.mxu0 0
        %2288 = vmatpush2.bf16.xpose.msra.mxu0 0
        %2289 = vmatprep.subr.bf16.mxu0 0
        %2290 = vmatpush2.bf16.xpose.msra.mxu0 0
        %2291 = vmatprep.subr.bf16.mxu0 0
        %2292 = vmatpush2.bf16.xpose.msra.mxu0 0
        %2293 = vmatprep.mubr.bf16.mxu0 0
        %2294 = vmatmul.mubr.bf16.gmra.mxu0 %v2238
        %v2295 = vpop.f32.mrf.mxu0
        %v2296 = vadd.f32 %v1087, %v2295
        %v2297 = vpop.f32.mrf.mxu0
        %v2298 = vpop.f32.mrf.mxu0
        %v2299 = vadd.f32 %v1088, %v2298
        %v2300 = vpop.f32.mrf.mxu0
        %2301 = vmatprep.mubr.bf16.mxu0 0
        %2302 = vmatmul.mubr.bf16.gmra.mxu0 %v2241
        %v2303 = vpop.f32.mrf.mxu0
        %v2304 = vadd.f32 %v1089, %v2303
        %v2305 = vpop.f32.mrf.mxu0
        %v2306 = vpop.f32.mrf.mxu0
        %v2307 = vadd.f32 %v1090, %v2306
        %v2308 = vpop.f32.mrf.mxu0
        %2309 = vmatprep.mubr.bf16.mxu0 0
        %2310 = vmatmul.mubr.bf16.gmra.mxu0 %v2244
        %v2311 = vpop.f32.mrf.mxu0
        %v2312 = vadd.f32 %v1091, %v2311
        %v2313 = vpop.f32.mrf.mxu0
        %v2314 = vpop.f32.mrf.mxu0
        %v2315 = vadd.f32 %v1092, %v2314
        %v2316 = vpop.f32.mrf.mxu0
        %2317 = vmatprep.mubr.bf16.mxu0 0
        %2318 = vmatmul.mubr.bf16.gmra.mxu0 %v2247
        %v2319 = vpop.f32.mrf.mxu0
        %v2320 = vadd.f32 %v1093, %v2319
        %v2321 = vpop.f32.mrf.mxu0
        %v2322 = vpop.f32.mrf.mxu0
        %v2323 = vadd.f32 %v1094, %v2322
        %v2324 = vpop.f32.mrf.mxu0
        %2325 = vdwg.mxu0
        %v2326 = vsel %vm1213, %v2296, -inf
        %2327 = vmax.xlane.f32.xlu0 %v2326
        %v2328 = vpop.xlane.xlu0 %2327
        %v2329 = vsel %vm1213, %v2299, -inf
        %2330 = vmax.xlane.f32.xlu0 %v2329
        %v2331 = vpop.xlane.xlu0 %2330
        %v2332 = vsel %vm1213, %v2304, -inf
        %2333 = vmax.xlane.f32.xlu0 %v2332
        %v2334 = vpop.xlane.xlu0 %2333
        %v2335 = vsel %vm1213, %v2307, -inf
        %2336 = vmax.xlane.f32.xlu0 %v2335
        %v2337 = vpop.xlane.xlu0 %2336
        %v2338 = vsel %vm1213, %v2312, -inf
        %2339 = vmax.xlane.f32.xlu0 %v2338
        %v2340 = vpop.xlane.xlu0 %2339
        %v2341 = vsel %vm1213, %v2315, -inf
        %2342 = vmax.xlane.f32.xlu0 %v2341
        %v2343 = vpop.xlane.xlu0 %2342
        %v2344 = vsel %vm1213, %v2320, -inf
        %2345 = vmax.xlane.f32.xlu0 %v2344
        %v2346 = vpop.xlane.xlu0 %2345
        %v2347 = vsel %vm1213, %v2323, -inf
        %2348 = vmax.xlane.f32.xlu0 %v2347
        %v2349 = vpop.xlane.xlu0 %2348
        %v2350 = vsub.f32 %v2296, %v2328
        %v2351 = vsub.f32 %v2299, %v2331
        %v2352 = vsub.f32 %v2304, %v2334
        %v2353 = vsub.f32 %v2307, %v2337
        %v2354 = vsub.f32 %v2312, %v2340
        %v2355 = vsub.f32 %v2315, %v2343
        %v2356 = vsub.f32 %v2320, %v2346
        %v2357 = vsub.f32 %v2323, %v2349
        %v2358 = vmul.f32 %v2350, 1.442695
        %v2359 = vpow.pop %v2358
        %v2360 = vmul.f32 %v2351, 1.442695
        %v2361 = vpow.pop %v2360
        %v2362 = vmul.f32 %v2352, 1.442695
        %v2363 = vpow.pop %v2362
        %v2364 = vmul.f32 %v2353, 1.442695
        %v2365 = vpow.pop %v2364
        %v2366 = vmul.f32 %v2354, 1.442695
        %v2367 = vpow.pop %v2366
        %v2368 = vmul.f32 %v2355, 1.442695
        %v2369 = vpow.pop %v2368
        %v2370 = vmul.f32 %v2356, 1.442695
        %v2371 = vpow.pop %v2370
        %v2372 = vmul.f32 %v2357, 1.442695
        %v2373 = vpow.pop %v2372
        %v2374 = vsel %vm1213, %v2359, 0.0
        %2375 = vadd.xlane.f32.xlu0 %v2374
        %v2376 = vpop.xlane.xlu0 %2375
        %v2377 = vsel %vm1213, %v2361, 0.0
        %2378 = vadd.xlane.f32.xlu0 %v2377
        %v2379 = vpop.xlane.xlu0 %2378
        %v2380 = vsel %vm1213, %v2363, 0.0
        %2381 = vadd.xlane.f32.xlu0 %v2380
        %v2382 = vpop.xlane.xlu0 %2381
        %v2383 = vsel %vm1213, %v2365, 0.0
        %2384 = vadd.xlane.f32.xlu0 %v2383
        %v2385 = vpop.xlane.xlu0 %2384
        %v2386 = vsel %vm1213, %v2367, 0.0
        %2387 = vadd.xlane.f32.xlu0 %v2386
        %v2388 = vpop.xlane.xlu0 %2387
        %v2389 = vsel %vm1213, %v2369, 0.0
        %2390 = vadd.xlane.f32.xlu0 %v2389
        %v2391 = vpop.xlane.xlu0 %2390
        %v2392 = vsel %vm1213, %v2371, 0.0
        %2393 = vadd.xlane.f32.xlu0 %v2392
        %v2394 = vpop.xlane.xlu0 %2393
        %v2395 = vsel %vm1213, %v2373, 0.0
        %2396 = vadd.xlane.f32.xlu0 %v2395
        %v2397 = vpop.xlane.xlu0 %2396
        %v2398 = vrcp.pop %v2376
        %v2399 = vrcp.pop %v2379
        %v2400 = vrcp.pop %v2382
        %v2401 = vrcp.pop %v2385
        %v2402 = vrcp.pop %v2388
        %v2403 = vrcp.pop %v2391
        %v2404 = vrcp.pop %v2394
        %v2405 = vrcp.pop %v2397
        %v2406 = vpack.c.bf16 %v2361, %v2359
        %v2407 = vpack.c.bf16 %v2365, %v2363
        %v2408 = vpack.c.bf16 %v2369, %v2367
        %v2409 = vpack.c.bf16 %v2373, %v2371
        %v2410 = vld [vmem:[#allocation4] sm:$0xf]
        %v2411 = vld [vmem:[#allocation4 + $0x4] sm:$0xf]
        %v2412 = vld [vmem:[#allocation4 + $0x8] sm:$0xf]
        %v2413 = vld [vmem:[#allocation4 + $0xc] sm:$0xf]
        %v2414 = vld [vmem:[#allocation4 + $0x10] sm:$0xf]
        %v2415 = vld [vmem:[#allocation4 + $0x14] sm:$0xf]
        %v2416 = vld [vmem:[#allocation4 + $0x18] sm:$0xf]
        %v2417 = vld [vmem:[#allocation4 + $0x1c] sm:$0xf]
        %v2426 = vunpack.c.l.b16 %v2410
        %v2427 = vunpack.c.l.b16 %v2411
        %v2428 = vunpack.c.l.b16 %v2412
        %v2429 = vunpack.c.l.b16 %v2413
        %v2430 = vunpack.c.l.b16 %v2414
        %v2431 = vunpack.c.l.b16 %v2415
        %v2432 = vunpack.c.l.b16 %v2416
        %v2433 = vunpack.c.l.b16 %v2417
        %v2434 = vpack.c.b16 %v2427, %v2426
        %v2435 = vpack.c.b16 %v2429, %v2428
        %v2436 = vpack.c.b16 %v2431, %v2430
        %v2437 = vpack.c.b16 %v2433, %v2432
        %2438 = vrot.lane.b32.xlu0 %v2434, 32
        %v2439 = vpop.permute.xlu0 %2438
        %2440 = vrot.lane.b32.xlu0 %v2435, 32
        %v2441 = vpop.permute.xlu0 %2440
        %2442 = vrot.lane.b32.xlu0 %v2436, 32
        %v2443 = vpop.permute.xlu0 %2442
        %2444 = vrot.lane.b32.xlu0 %v2437, 32
        %v2445 = vpop.permute.xlu0 %2444
        %v2451 = vsel %vm1213, %v2406, 0
        %v2454 = vsel %vm1213, %v2407, 0
        %v2457 = vsel %vm1213, %v2408, 0
        %v2460 = vsel %vm1213, %v2409, 0
        %2462 = vmatprep.subr.bf16.mxu0 0
        %2463 = vmatpush1.bf16.msra.mxu0 0
        %2464 = vmatprep.subr.bf16.mxu0 0
        %2465 = vmatpush1.bf16.msra.mxu0 0
        %2466 = vmatprep.subr.bf16.mxu0 0
        %2467 = vmatpush1.bf16.msra.mxu0 0
        %2468 = vmatprep.subr.bf16.mxu0 0
        %2469 = vmatpush1.bf16.msra.mxu0 0
        %2470 = vmatprep.subr.bf16.mxu0 0
        %2471 = vmatpush1.bf16.msra.mxu0 %v2445
        %2472 = vmatprep.subr.bf16.mxu0 0
        %2473 = vmatpush1.bf16.msra.mxu0 %v2443
        %2474 = vmatprep.subr.bf16.mxu0 0
        %2475 = vmatpush1.bf16.msra.mxu0 %v2441
        %2476 = vmatprep.subr.bf16.mxu0 0
        %2477 = vmatpush1.bf16.msra.mxu0 %v2439
        %2478 = vmatprep.subr.bf16.mxu0 0
        %2479 = vmatpush2.bf16.msra.mxu0 0
        %2480 = vmatprep.subr.bf16.mxu0 0
        %2481 = vmatpush2.bf16.msra.mxu0 0
        %2482 = vmatprep.subr.bf16.mxu0 0
        %2483 = vmatpush2.bf16.msra.mxu0 0
        %2484 = vmatprep.subr.bf16.mxu0 0
        %2485 = vmatpush2.bf16.msra.mxu0 0
        %2486 = vmatprep.subr.bf16.mxu0 0
        %2487 = vmatpush2.bf16.msra.mxu0 0
        %2488 = vmatprep.subr.bf16.mxu0 0
        %2489 = vmatpush2.bf16.msra.mxu0 0
        %2490 = vmatprep.subr.bf16.mxu0 0
        %2491 = vmatpush2.bf16.msra.mxu0 0
        %2492 = vmatprep.subr.bf16.mxu0 0
        %2493 = vmatpush2.bf16.msra.mxu0 0
        %2494 = vmatprep.mubr.bf16.mxu0 0
        %2495 = vmatmul.mubr.bf16.gmra.mxu0 %v2451
        %v2496 = vpop.f32.mrf.mxu0
        %v2497 = vadd.f32 0.0, %v2496
        %v2498 = vpop.f32.mrf.mxu0
        %v2499 = vpop.f32.mrf.mxu0
        %v2500 = vadd.f32 0.0, %v2499
        %v2501 = vpop.f32.mrf.mxu0
        %2502 = vmatprep.mubr.bf16.mxu0 0
        %2503 = vmatmul.mubr.bf16.gmra.mxu0 %v2454
        %v2504 = vpop.f32.mrf.mxu0
        %v2505 = vadd.f32 0.0, %v2504
        %v2506 = vpop.f32.mrf.mxu0
        %v2507 = vpop.f32.mrf.mxu0
        %v2508 = vadd.f32 0.0, %v2507
        %v2509 = vpop.f32.mrf.mxu0
        %2510 = vmatprep.mubr.bf16.mxu0 0
        %2511 = vmatmul.mubr.bf16.gmra.mxu0 %v2457
        %v2512 = vpop.f32.mrf.mxu0
        %v2513 = vadd.f32 0.0, %v2512
        %v2514 = vpop.f32.mrf.mxu0
        %v2515 = vpop.f32.mrf.mxu0
        %v2516 = vadd.f32 0.0, %v2515
        %v2517 = vpop.f32.mrf.mxu0
        %2518 = vmatprep.mubr.bf16.mxu0 0
        %2519 = vmatmul.mubr.bf16.gmra.mxu0 %v2460
        %v2520 = vpop.f32.mrf.mxu0
        %v2521 = vadd.f32 0.0, %v2520
        %v2522 = vpop.f32.mrf.mxu0
        %v2523 = vpop.f32.mrf.mxu0
        %v2524 = vadd.f32 0.0, %v2523
        %v2525 = vpop.f32.mrf.mxu0
        %2526 = vdwg.mxu0
        %v2527 = vmul.f32 %v2497, %v2398
        %v2528 = vmul.f32 %v2500, %v2399
        %v2529 = vmul.f32 %v2505, %v2400
        %v2530 = vmul.f32 %v2508, %v2401
        %v2531 = vmul.f32 %v2513, %v2402
        %v2532 = vmul.f32 %v2516, %v2403
        %v2533 = vmul.f32 %v2521, %v2404
        %v2534 = vmul.f32 %v2524, %v2405
        %2543 = vrot.lane.b32.xlu0 %v2527, 96
        %v2544 = vpop.permute.xlu0 %2543
        %2545 = vrot.lane.b32.xlu0 %v2528, 96
        %v2546 = vpop.permute.xlu0 %2545
        %2547 = vrot.lane.b32.xlu0 %v2529, 96
        %v2548 = vpop.permute.xlu0 %2547
        %2549 = vrot.lane.b32.xlu0 %v2530, 96
        %v2550 = vpop.permute.xlu0 %2549
        %2551 = vrot.lane.b32.xlu0 %v2531, 96
        %v2552 = vpop.permute.xlu0 %2551
        %2553 = vrot.lane.b32.xlu0 %v2532, 96
        %v2554 = vpop.permute.xlu0 %2553
        %2555 = vrot.lane.b32.xlu0 %v2533, 96
        %v2556 = vpop.permute.xlu0 %2555
        %2557 = vrot.lane.b32.xlu0 %v2534, 96
        %v2558 = vpop.permute.xlu0 %2557
        %vm2567 = vcmask 1048320
        %2568 = vst.msk [vmem:[#allocation2] sm:$0xff] %vm2567, %v2544
        %2569 = vst.msk [vmem:[#allocation2 + $0x8] sm:$0xff] %vm2567, %v2546
        %2570 = vst.msk [vmem:[#allocation2 + $0x10] sm:$0xff] %vm2567, %v2548
        %2571 = vst.msk [vmem:[#allocation2 + $0x18] sm:$0xff] %vm2567, %v2550
        %2572 = vst.msk [vmem:[#allocation2 + $0x20] sm:$0xff] %vm2567, %v2552
        %2573 = vst.msk [vmem:[#allocation2 + $0x28] sm:$0xff] %vm2567, %v2554
        %2574 = vst.msk [vmem:[#allocation2 + $0x30] sm:$0xff] %vm2567, %v2556
        %2575 = vst.msk [vmem:[#allocation2 + $0x38] sm:$0xff] %vm2567, %v2558
        %v2576 = vld [vmem:[#allocation2] sm:$0xff]
        %v2577 = vld [vmem:[#allocation2 + $0x8] sm:$0xff]
        %v2578 = vld [vmem:[#allocation2 + $0x10] sm:$0xff]
        %v2579 = vld [vmem:[#allocation2 + $0x18] sm:$0xff]
        %v2580 = vld [vmem:[#allocation2 + $0x20] sm:$0xff]
        %v2581 = vld [vmem:[#allocation2 + $0x28] sm:$0xff]
        %v2582 = vld [vmem:[#allocation2 + $0x30] sm:$0xff]
        %v2583 = vld [vmem:[#allocation2 + $0x38] sm:$0xff]
        %v2584 = vpack.c.bf16 %v2577, %v2576
        %v2585 = vpack.c.bf16 %v2579, %v2578
        %v2586 = vpack.c.bf16 %v2581, %v2580
        %v2587 = vpack.c.bf16 %v2583, %v2582
        %v2588 = vld [vmem:[#allocation13] sm:$0xf]
        %v2589 = vld [vmem:[#allocation13 + $0x4] sm:$0xf]
        %v2590 = vld [vmem:[#allocation13 + $0x8] sm:$0xf]
        %v2591 = vld [vmem:[#allocation13 + $0xc] sm:$0xf]
        %v2592 = vld [vmem:[#allocation13 + $0x10] sm:$0xf]
        %v2593 = vld [vmem:[#allocation13 + $0x14] sm:$0xf]
        %v2594 = vld [vmem:[#allocation13 + $0x18] sm:$0xf]
        %v2595 = vld [vmem:[#allocation13 + $0x1c] sm:$0xf]
        %v2596 = vld [vmem:[#allocation13 + $0x20] sm:$0xf]
        %v2597 = vld [vmem:[#allocation13 + $0x24] sm:$0xf]
        %v2598 = vld [vmem:[#allocation13 + $0x28] sm:$0xf]
        %v2599 = vld [vmem:[#allocation13 + $0x2c] sm:$0xf]
        %v2600 = vld [vmem:[#allocation13 + $0x30] sm:$0xf]
        %v2601 = vld [vmem:[#allocation13 + $0x34] sm:$0xf]
        %v2602 = vld [vmem:[#allocation13 + $0x38] sm:$0xf]
        %v2603 = vld [vmem:[#allocation13 + $0x3c] sm:$0xf]
        %v2604 = vld [vmem:[%s8] sm:$0x1]
        %v2606 = vlaneseq
        %v2607 = vshrl.u32 %v2606, 7
        %v2608 = vsub.s32 0, %v2607
        %v2609 = vrot.slane %v2604, %v2608
        %v2627 = vunpack.c.l.b16 %v2588
        %v2628 = vunpack.c.l.b16 %v2589
        %v2629 = vunpack.c.l.b16 %v2590
        %v2630 = vunpack.c.l.b16 %v2591
        %v2631 = vunpack.c.l.b16 %v2592
        %v2632 = vunpack.c.l.b16 %v2593
        %v2633 = vunpack.c.l.b16 %v2594
        %v2634 = vunpack.c.l.b16 %v2595
        %v2635 = vunpack.c.l.b16 %v2596
        %v2636 = vunpack.c.l.b16 %v2597
        %v2637 = vunpack.c.l.b16 %v2598
        %v2638 = vunpack.c.l.b16 %v2599
        %v2639 = vunpack.c.l.b16 %v2600
        %v2640 = vunpack.c.l.b16 %v2601
        %v2641 = vunpack.c.l.b16 %v2602
        %v2642 = vunpack.c.l.b16 %v2603
        %v2643 = vpack.c.b16 %v2628, %v2627
        %v2644 = vpack.c.b16 %v2630, %v2629
        %v2645 = vpack.c.b16 %v2632, %v2631
        %v2646 = vpack.c.b16 %v2634, %v2633
        %v2647 = vpack.c.b16 %v2636, %v2635
        %v2648 = vpack.c.b16 %v2638, %v2637
        %v2649 = vpack.c.b16 %v2640, %v2639
        %v2650 = vpack.c.b16 %v2642, %v2641
        %2659 = vmatprep.subr.bf16.mxu0 0
        %2660 = vmatpush1.bf16.msra.mxu0 %v2650
        %2661 = vmatprep.subr.bf16.mxu0 0
        %2662 = vmatpush1.bf16.msra.mxu0 %v2649
        %2663 = vmatprep.subr.bf16.mxu0 0
        %2664 = vmatpush1.bf16.msra.mxu0 %v2648
        %2665 = vmatprep.subr.bf16.mxu0 0
        %2666 = vmatpush1.bf16.msra.mxu0 %v2647
        %2667 = vmatprep.subr.bf16.mxu0 0
        %2668 = vmatpush1.bf16.msra.mxu0 %v2646
        %2669 = vmatprep.subr.bf16.mxu0 0
        %2670 = vmatpush1.bf16.msra.mxu0 %v2645
        %2671 = vmatprep.subr.bf16.mxu0 0
        %2672 = vmatpush1.bf16.msra.mxu0 %v2644
        %2673 = vmatprep.subr.bf16.mxu0 0
        %2674 = vmatpush1.bf16.msra.mxu0 %v2643
        %2675 = vmatprep.subr.bf16.mxu0 0
        %2676 = vmatpush2.bf16.msra.mxu0 0
        %2677 = vmatprep.subr.bf16.mxu0 0
        %2678 = vmatpush2.bf16.msra.mxu0 0
        %2679 = vmatprep.subr.bf16.mxu0 0
        %2680 = vmatpush2.bf16.msra.mxu0 0
        %2681 = vmatprep.subr.bf16.mxu0 0
        %2682 = vmatpush2.bf16.msra.mxu0 0
        %2683 = vmatprep.subr.bf16.mxu0 0
        %2684 = vmatpush2.bf16.msra.mxu0 0
        %2685 = vmatprep.subr.bf16.mxu0 0
        %2686 = vmatpush2.bf16.msra.mxu0 0
        %2687 = vmatprep.subr.bf16.mxu0 0
        %2688 = vmatpush2.bf16.msra.mxu0 0
        %2689 = vmatprep.subr.bf16.mxu0 0
        %2690 = vmatpush2.bf16.msra.mxu0 0
        %2691 = vmatprep.mubr.bf16.mxu0 0
        %2692 = vmatmul.mubr.bf16.gmra.mxu0 %v2584
        %v2693 = vpop.f32.mrf.mxu0
        %v2694 = vadd.f32 %v2609, %v2693
        %v2695 = vpop.f32.mrf.mxu0
        %v2696 = vpop.f32.mrf.mxu0
        %v2697 = vadd.f32 %v2609, %v2696
        %v2698 = vpop.f32.mrf.mxu0
        %2699 = vmatprep.mubr.bf16.mxu0 0
        %2700 = vmatmul.mubr.bf16.gmra.mxu0 %v2585
        %v2701 = vpop.f32.mrf.mxu0
        %v2702 = vadd.f32 %v2609, %v2701
        %v2703 = vpop.f32.mrf.mxu0
        %v2704 = vpop.f32.mrf.mxu0
        %v2705 = vadd.f32 %v2609, %v2704
        %v2706 = vpop.f32.mrf.mxu0
        %2707 = vmatprep.mubr.bf16.mxu0 0
        %2708 = vmatmul.mubr.bf16.gmra.mxu0 %v2586
        %v2709 = vpop.f32.mrf.mxu0
        %v2710 = vadd.f32 %v2609, %v2709
        %v2711 = vpop.f32.mrf.mxu0
        %v2712 = vpop.f32.mrf.mxu0
        %v2713 = vadd.f32 %v2609, %v2712
        %v2714 = vpop.f32.mrf.mxu0
        %2715 = vmatprep.mubr.bf16.mxu0 0
        %2716 = vmatmul.mubr.bf16.gmra.mxu0 %v2587
        %v2717 = vpop.f32.mrf.mxu0
        %v2718 = vadd.f32 %v2609, %v2717
        %v2719 = vpop.f32.mrf.mxu0
        %v2720 = vpop.f32.mrf.mxu0
        %v2721 = vadd.f32 %v2609, %v2720
        %v2722 = vpop.f32.mrf.mxu0
        %2723 = vdwg.mxu0
        %2724 = vst [vmem:[%s472] sm:$0xff] %v2694
        %2725 = vst [vmem:[%s472 + $0x8] sm:$0xff] %v2697
        %2726 = vst [vmem:[%s472 + $0x10] sm:$0xff] %v2702
        %2727 = vst [vmem:[%s472 + $0x18] sm:$0xff] %v2705
        %2728 = vst [vmem:[%s472 + $0x20] sm:$0xff] %v2710
        %2729 = vst [vmem:[%s472 + $0x28] sm:$0xff] %v2713
        %2730 = vst [vmem:[%s472 + $0x30] sm:$0xff] %v2718
        %2731 = vst [vmem:[%s472 + $0x38] sm:$0xff] %v2721
        %s2732 = sand.u32 %s261, 1
        %s2733 = scalar_lea.sflag [#allocation7], %s2732
        %s2734 = sand.u32 %s261, 1
        %s2735 = smul.addr %s2734, 64
        %s2736 = scalar_lea.vmem [#allocation14], %s2735
        // Predicated region
        $region81: #{tpu_custom_call.1} parent=55 // pred_check
          %p2737 = pneg %p271
        $region82: #{tpu_custom_call.1} parent=55 // pred_check_branch
          %2739 = sbr.rel (%p2737) target = $region84
        $region83: #{tpu_custom_call.1} parent=55 // pred_region
          %s2740 = smul.u32 8, %s31
          %s2742 = ssub.s32 1024, 1024
          %2743 = vsyncadd %s2733, %s2742
          %s2744 = smul.addr %s30, 16
          %s2745 = sadd.s32 %s2740, %s2744
          %s2746 = smul.addr %s2745, 128
          %s2747 = scalar_lea.hbm %s9, %s2746
          %s2748 = sshll.u32 %s2736, 4
          %s2749 = int_to_ptr.vmem [resolvable:$true] %s2748
          %2754 = dma.vmem_to_hbm [thread:$0]  %s2749, 1024, %s2747, %s2733, 128, 128, 8
        $region84: #{tpu_custom_call.1} parent=55 // pred_fallthru
          _
      $region56: #{tpu_custom_call.1} parent=5 // pred_fallthru
        _
      %p2755 = scmp.le.s32.totalorder 2, %s21
      // Predicated region
      $region85: #{tpu_custom_call.1} parent=5 // pred_check
        %p2756 = pneg %p2755
      $region86: #{tpu_custom_call.1} parent=5 // pred_check_branch
        %2758 = sbr.rel (%p2756) target = $region88
      $region87: #{tpu_custom_call.1} parent=5 // pred_region
        %s2759 = ssub.s32 %s21, 2
        // Predicated region
        $region89: #{tpu_custom_call.1} parent=87 // pred_check
          %p2760 = pneg %p277
        $region90: #{tpu_custom_call.1} parent=87 // pred_check_branch
          %2762 = sbr.rel (%p2760) target = $region92
        $region91: #{tpu_custom_call.1} parent=87 // pred_region
          %s2763 = sand.u32 %s262, 1
          %s2764 = scalar_lea.sflag [#allocation7], %s2763
          %s2765 = sand.u32 %s262, 1
          %s2766 = smul.addr %s2765, 64
          %s2767 = scalar_lea.vmem [#allocation14], %s2766
          %2768 = dma.done %s2764, 1024
        $region92: #{tpu_custom_call.1} parent=87 // pred_fallthru
          _
      $region88: #{tpu_custom_call.1} parent=5 // pred_fallthru
        _
    $region6: #{tpu_custom_call.1} parent=1 // loop_footer
      %s25 = sadd.s32 1, %s21
    $region7: #{tpu_custom_call.1} parent=1 // loop_footer_branch
      %20 = sbr.rel target = $region3
    $region8: #{tpu_custom_call.1} parent=1 // loop_exit
      _
    %2769 = vsyncpa [#allocation6], 1
    %s2770 = scalar_lea.sflag [#allocation6], 1
    %2771 = vsyncpa %s2770, 1
    %2772 = vsyncpa [#allocation9], 1
    %2773 = vsyncpa [#allocation12], 1
    %2774 = vsyncpa [#allocation7], 1
    %s2775 = scalar_lea.sflag [#allocation7], 1
    %2776 = vsyncpa %s2775, 1

</llo_original>
